<compile_context>
chip_gen: v7x
topology: tpu7x:2x2x1
jax: 0.10.0
libtpu: 0.0.40
codegen_flags: <defaults>
</compile_context>

<pallas_src>
import functools

import jax
import jax.numpy as jnp
from jax.experimental import pallas as pl
from jax.experimental.pallas import tpu as pltpu  # noqa: F401  (TPU backend)

# ----------------------------- configuration --------------------------------
B = 2            # batch size
T = 8            # question sequence length
H = 32           # cfgs.hidden_size
FLAT = 32        # cfgs.flat_out_size  (== H so that FLAT + H == 2*H)
OPT = 4          # cfgs.opt_num
CIN, IMG = 3, 16 # diagram image channels / spatial size
KSZ, STRIDE, PAD, COUT = 3, 2, 1, 8   # SimCLR conv encoder
KPAD = 32        # im2col contraction dim (27) zero-padded to 8-aligned 32


# ----------------------------- the fused Pallas kernel -----------------------
def _fused_net_kernel(
        patches_ref, pool_ref, que2d_ref, rep_t_ref, rept_t_ref,
        opt2d_ref, rep_opt_ref,
        conv_w_ref, conv_b_ref,
        p1_w_ref, p1_b_ref, p2_w_ref, p2_b_ref,
        wq_ref, bq_ref, wv_ref, bv_ref, wp_ref, bp_ref,
        flat_w_ref, flat_b_ref,
        c1a_w_ref, c1b_w_ref, c1_b_ref, c2_w_ref, c2_b_ref,
        o_ref, *, seq_len):
    """Whole forward pass for the full batch. Everything 2-D, resident in VMEM.

    patches : (B*HW, KPAD)  im2col rows of the diagram image (K zero-padded)
    pool    : (B, B*HW)     1/HW block-diagonal -> global average pool
    que2d   : (B*T, H)      question embeddings, batch*time flattened
    rep_t   : (B*T, B)      one-hot segment membership (broadcast per-batch)
    rept_t  : (B, B*T)      transpose of rep_t (segment sums)
    opt2d   : (B*OPT, H)    option embeddings, batch*option flattened
    rep_opt : (B*OPT, B)    one-hot option->batch membership
    output  : (B*OPT, 1)    classifier scores
    """
    relu = lambda z: jnp.maximum(z, 0.0)
    dot = lambda a, b: jnp.dot(a, b, preferred_element_type=jnp.float32)

    # ---- SimCLR stand-in: conv(3x3,s2)+ReLU -> GAP -> projection head -------
    # TODO(synk): SimCLR definition not provided; small conv encoder stand-in.
    conv = relu(dot(patches_ref[...], conv_w_ref[...]) + conv_b_ref[...])   # (B*HW, COUT)
    feat = dot(pool_ref[...], conv)                                         # (B, COUT) GAP
    h1 = relu(dot(feat, p1_w_ref[...]) + p1_b_ref[...])                     # (B, H)
    dia = dot(h1, p2_w_ref[...]) + p2_b_ref[...]                            # (B, H)

    # ---- BAN stand-in: single-glimpse bilinear attention, whole batch -------
    # TODO(synk): BAN definition not provided; bilinear-attention stand-in.
    q2d = que2d_ref[...]                                                    # (B*T, H)
    q_p = relu(dot(q2d, wq_ref[...]) + bq_ref[...])                         # (B*T, H)
    v_p = relu(dot(dia, wv_ref[...]) + bv_ref[...])                         # (B, H)
    v_full = dot(rep_t_ref[...], v_p)                                       # (B*T, H)

    logits = jnp.sum(q_p * v_full, axis=-1, keepdims=True)                  # (B*T, 1)
    # per-segment softmax over T; a single global max shift is valid per
    # segment (softmax is shift invariant), keeps everything 2-D.
    m = jnp.max(logits)
    p = jnp.exp(logits - m)
    denom = dot(rep_t_ref[...], dot(rept_t_ref[...], p))                    # (B*T, 1)
    att = p / denom                                                         # (B*T, 1)

    summed = dot(rept_t_ref[...], att * q_p)                                # (B, H)
    b_emb = summed * v_p                                                    # (B, H)
    proj = relu(dot(b_emb, wp_ref[...]) + bp_ref[...])                      # (B, H)

    # fusion_feat.sum(1) == sum_t(q) + T * proj   (broadcast residual)
    q_sum = dot(rept_t_ref[...], q2d)                                       # (B, H)
    fusion_sum = q_sum + jnp.float32(seq_len) * proj                        # (B, H)

    # ---- flatten (weight_norm pre-folded) ------------------------------------
    flat = relu(dot(fusion_sum, flat_w_ref[...]) + flat_b_ref[...])         # (B, FLAT)

    # ---- classifier: c1 split over [fusion_feat | opt_feat], c2 = row-reduce -
    a_part = dot(flat, c1a_w_ref[...])                                      # (B, FLAT)
    a_full = dot(rep_opt_ref[...], a_part)                                  # (B*OPT, FLAT)
    b_part = dot(opt2d_ref[...], c1b_w_ref[...])                            # (B*OPT, FLAT)
    hcls = relu(a_full + b_part + c1_b_ref[...])                            # (B*OPT, FLAT)
    score = jnp.sum(hcls * c2_w_ref[...], axis=-1, keepdims=True) + c2_b_ref[...]
    o_ref[...] = score.astype(o_ref.dtype)                                  # (B*OPT, 1)


# ----------------------------- glue helpers ----------------------------------
def extract_patches(x_nhwc, k, stride, pad):
    """im2col: (B, Hh, Ww, C) -> (B, Ho, Wo, k*k*C), row layout (kh, kw, c)."""
    Bx, Hh, Ww, C = x_nhwc.shape
    xp = jnp.pad(x_nhwc, ((0, 0), (pad, pad), (pad, pad), (0, 0)))
    Ho = (Hh + 2 * pad - k) // stride + 1
    Wo = (Ww + 2 * pad - k) // stride + 1
    cols = []
    for di in range(k):
        for dj in range(k):
            cols.append(xp[:, di:di + stride * Ho:stride, dj:dj + stride * Wo:stride, :])
    return jnp.concatenate(cols, axis=-1)


# ----------------------------- parameters ------------------------------------
def init_params(key):
    ks = jax.random.split(key, 24)
    w = lambda k, s, sc=0.1: (jax.random.normal(k, s, jnp.float32) * sc)
    return dict(
        # SimCLR stand-in: conv(3x3,s2) + GAP + 2-layer projection head
        conv_w=w(ks[0], (KSZ * KSZ * CIN, COUT)), conv_b=w(ks[1], (COUT,)),
        proj1_w=w(ks[2], (COUT, H)), proj1_b=w(ks[3], (H,)),
        proj2_w=w(ks[4], (H, H)), proj2_b=w(ks[5], (H,)),
        # BAN stand-in
        ban_wq=w(ks[6], (H, H)), ban_bq=w(ks[7], (H,)),
        ban_wv=w(ks[8], (H, H)), ban_bv=w(ks[9], (H,)),
        ban_wp=w(ks[10], (H, H)), ban_bp=w(ks[11], (H,)),
        # flatten: weight_norm(Linear(H, FLAT)) + ReLU + Dropout(eval)
        flat_v=w(ks[12], (H, FLAT)), flat_g=jnp.float32(1.0), flat_b=w(ks[13], (FLAT,)),
        # classifier: weight_norm(Linear(2H, FLAT)) + ReLU + Dropout(eval)
        #             + weight_norm(Linear(FLAT, 1))
        c1_v=w(ks[14], (2 * H, FLAT)), c1_g=jnp.float32(1.0), c1_b=w(ks[15], (FLAT,)),
        c2_v=w(ks[16], (FLAT, 1)), c2_g=jnp.float32(1.0), c2_b=w(ks[17], (1,)),
    )


def prepare_params(raw):
    """One-time (outside jit) param prep: fold weight_norm, pad conv K, reshape
    biases to (1, N), split the classifier weight over [fusion|opt] halves."""
    f32 = jnp.float32

    def wn(v, g):  # torch weight_norm(dim=None): w = g * v / ||v||_F
        return (g * v / jnp.sqrt(jnp.sum(v * v))).astype(f32)

    kraw = KSZ * KSZ * CIN
    conv_w = jnp.pad(raw["conv_w"].astype(f32), ((0, KPAD - kraw), (0, 0)))
    c1_w = wn(raw["c1_v"], raw["c1_g"])                       # (2H, FLAT)
    return dict(
        conv_w=conv_w, conv_b=raw["conv_b"].reshape(1, COUT).astype(f32),
        p1_w=raw["proj1_w"].astype(f32), p1_b=raw["proj1_b"].reshape(1, H).astype(f32),
        p2_w=raw["proj2_w"].astype(f32), p2_b=raw["proj2_b"].reshape(1, H).astype(f32),
        wq=raw["ban_wq"].astype(f32), bq=raw["ban_bq"].reshape(1, H).astype(f32),
        wv=raw["ban_wv"].astype(f32), bv=raw["ban_bv"].reshape(1, H).astype(f32),
        wp=raw["ban_wp"].astype(f32), bp=raw["ban_bp"].reshape(1, H).astype(f32),
        flat_w=wn(raw["flat_v"], raw["flat_g"]),
        flat_b=raw["flat_b"].reshape(1, FLAT).astype(f32),
        c1a_w=c1_w[:FLAT], c1b_w=c1_w[FLAT:],
        c1_b=raw["c1_b"].reshape(1, FLAT).astype(f32),
        c2_w=wn(raw["c2_v"], raw["c2_g"]).reshape(1, FLAT),   # (FLAT,1) -> row
        c2_b=raw["c2_b"].reshape(1, 1).astype(f32),
    )


# ----------------------------- forward ----------------------------------------
def net_forward(params, que_emb, dia_f, opt_emb, dia_matrix, dia_node_emb):
    # dia_matrix / dia_node_emb are unused by the reference forward pass.
    batch, seq, hid = que_emb.shape
    opt_num = opt_emb.shape[1]
    f32 = jnp.float32

    # ---- im2col for the SimCLR conv (pure layout ops, done by XLA) ----------
    x = jnp.transpose(dia_f, (0, 2, 3, 1))                      # NCHW -> NHWC
    patches = extract_patches(x, KSZ, STRIDE, PAD)              # (B, Ho, Wo, 27)
    Ho, Wo = patches.shape[1], patches.shape[2]
    hw = Ho * Wo
    kraw = KSZ * KSZ * CIN
    p2d = patches.reshape(batch * hw, kraw)
    p2d = jnp.pad(p2d, ((0, 0), (0, KPAD - kraw)))              # K: 27 -> 32

    que2d = que_emb.reshape(batch * seq, hid)                   # (B*T, H)
    opt2d = opt_emb.reshape(batch * opt_num, hid)               # squeeze(2)+flatten

    # ---- constant segment / broadcast matrices (constant-folded under jit) --
    pool = ((jnp.arange(batch)[:, None] ==
             (jnp.arange(batch * hw)[None, :] // hw)).astype(f32) / hw)      # (B, B*HW)
    rep_t = ((jnp.arange(batch * seq)[:, None] // seq) ==
             jnp.arange(batch)[None, :]).astype(f32)                         # (B*T, B)
    rept_t = rep_t.T                                                          # (B, B*T)
    rep_opt = ((jnp.arange(batch * opt_num)[:, None] // opt_num) ==
               jnp.arange(batch)[None, :]).astype(f32)                        # (B*OPT, B)

    operands = (
        p2d, pool, que2d, rep_t, rept_t, opt2d, rep_opt,
        params["conv_w"], params["conv_b"],
        params["p1_w"], params["p1_b"], params["p2_w"], params["p2_b"],
        params["wq"], params["bq"], params["wv"], params["bv"],
        params["wp"], params["bp"],
        params["flat_w"], params["flat_b"],
        params["c1a_w"], params["c1b_w"], params["c1_b"],
        params["c2_w"], params["c2_b"],
    )

    def full_spec(a):
        nd = a.ndim
        return pl.BlockSpec(a.shape, lambda i, _nd=nd: (0,) * _nd)

    kernel = functools.partial(_fused_net_kernel, seq_len=seq)
    score = pl.pallas_call(
        kernel,
        out_shape=jax.ShapeDtypeStruct((batch * opt_num, 1), jnp.float32),
        grid=(1,),
        in_specs=[full_spec(a) for a in operands],
        out_specs=pl.BlockSpec((batch * opt_num, 1), lambda i: (0, 0)),
    )(*operands)

    return score.reshape(batch, opt_num)                        # squeeze(-1)


# ----------------------------- main -------------------------------------------
if __name__ == "__main__":
    key = jax.random.PRNGKey(0)
    kp, k1, k2, k3, k4, k5 = jax.random.split(key, 6)

    raw_params = init_params(kp)
    params = prepare_params(raw_params)     # weight_norm folded / K padded ONCE

    que_emb = jax.random.normal(k1, (B, T, H), jnp.float32)
    dia_f = jax.random.normal(k2, (B, CIN, IMG, IMG), jnp.float32)   # NCHW like torch
    opt_emb = jax.random.normal(k3, (B, OPT, 1, H), jnp.float32)
    dia_matrix = jax.random.normal(k4, (B, T, T), jnp.float32)       # unused
    dia_node_emb = jax.random.normal(k5, (B, T, H), jnp.float32)     # unused

    fwd = jax.jit(net_forward)
    proj_feat = fwd(params, que_emb, dia_f, opt_emb, dia_matrix, dia_node_emb)
    jax.block_until_ready(proj_feat)
    assert proj_feat.shape == (B, OPT)
    print("KERNEL_OK")
</pallas_src>

<mosaic_0001>
module attributes {stable_mosaic.version = 11 : i64} {
  func.func @_fused_net_kernel(%arg0: i32, %arg1: memref<128x32xf32, #tpu.memory_space<vmem>>, %arg2: memref<2x128xf32, #tpu.memory_space<vmem>>, %arg3: memref<16x32xf32, #tpu.memory_space<vmem>>, %arg4: memref<16x2xf32, #tpu.memory_space<vmem>>, %arg5: memref<2x16xf32, #tpu.memory_space<vmem>>, %arg6: memref<8x32xf32, #tpu.memory_space<vmem>>, %arg7: memref<8x2xf32, #tpu.memory_space<vmem>>, %arg8: memref<32x8xf32, #tpu.memory_space<vmem>>, %arg9: memref<1x8xf32, #tpu.memory_space<vmem>>, %arg10: memref<8x32xf32, #tpu.memory_space<vmem>>, %arg11: memref<1x32xf32, #tpu.memory_space<vmem>>, %arg12: memref<32x32xf32, #tpu.memory_space<vmem>>, %arg13: memref<1x32xf32, #tpu.memory_space<vmem>>, %arg14: memref<32x32xf32, #tpu.memory_space<vmem>>, %arg15: memref<1x32xf32, #tpu.memory_space<vmem>>, %arg16: memref<32x32xf32, #tpu.memory_space<vmem>>, %arg17: memref<1x32xf32, #tpu.memory_space<vmem>>, %arg18: memref<32x32xf32, #tpu.memory_space<vmem>>, %arg19: memref<1x32xf32, #tpu.memory_space<vmem>>, %arg20: memref<32x32xf32, #tpu.memory_space<vmem>>, %arg21: memref<1x32xf32, #tpu.memory_space<vmem>>, %arg22: memref<32x32xf32, #tpu.memory_space<vmem>>, %arg23: memref<32x32xf32, #tpu.memory_space<vmem>>, %arg24: memref<1x32xf32, #tpu.memory_space<vmem>>, %arg25: memref<1x32xf32, #tpu.memory_space<vmem>>, %arg26: memref<1x1xf32, #tpu.memory_space<vmem>>, %arg27: memref<8x1xf32, #tpu.memory_space<vmem>>) attributes {dimension_semantics = [#tpu.dimension_semantics<arbitrary>], iteration_bounds = array<i64: 1>, scalar_prefetch = 0 : i64, scratch_operands = 0 : i64, tpu.core_type = #tpu.core_type<tc>, window_params = [{pipeline_mode = #tpu.pipeline_mode<synchronous>, transform_indices = @transform_0, window_bounds = array<i64: 128, 32>}, {pipeline_mode = #tpu.pipeline_mode<synchronous>, transform_indices = @transform_1, window_bounds = array<i64: 2, 128>}, {pipeline_mode = #tpu.pipeline_mode<synchronous>, transform_indices = @transform_2, window_bounds = array<i64: 16, 32>}, {pipeline_mode = #tpu.pipeline_mode<synchronous>, transform_indices = @transform_3, window_bounds = array<i64: 16, 2>}, {pipeline_mode = #tpu.pipeline_mode<synchronous>, transform_indices = @transform_4, window_bounds = array<i64: 2, 16>}, {pipeline_mode = #tpu.pipeline_mode<synchronous>, transform_indices = @transform_5, window_bounds = array<i64: 8, 32>}, {pipeline_mode = #tpu.pipeline_mode<synchronous>, transform_indices = @transform_6, window_bounds = array<i64: 8, 2>}, {pipeline_mode = #tpu.pipeline_mode<synchronous>, transform_indices = @transform_7, window_bounds = array<i64: 32, 8>}, {pipeline_mode = #tpu.pipeline_mode<synchronous>, transform_indices = @transform_8, window_bounds = array<i64: 1, 8>}, {pipeline_mode = #tpu.pipeline_mode<synchronous>, transform_indices = @transform_9, window_bounds = array<i64: 8, 32>}, {pipeline_mode = #tpu.pipeline_mode<synchronous>, transform_indices = @transform_10, window_bounds = array<i64: 1, 32>}, {pipeline_mode = #tpu.pipeline_mode<synchronous>, transform_indices = @transform_11, window_bounds = array<i64: 32, 32>}, {pipeline_mode = #tpu.pipeline_mode<synchronous>, transform_indices = @transform_12, window_bounds = array<i64: 1, 32>}, {pipeline_mode = #tpu.pipeline_mode<synchronous>, transform_indices = @transform_13, window_bounds = array<i64: 32, 32>}, {pipeline_mode = #tpu.pipeline_mode<synchronous>, transform_indices = @transform_14, window_bounds = array<i64: 1, 32>}, {pipeline_mode = #tpu.pipeline_mode<synchronous>, transform_indices = @transform_15, window_bounds = array<i64: 32, 32>}, {pipeline_mode = #tpu.pipeline_mode<synchronous>, transform_indices = @transform_16, window_bounds = array<i64: 1, 32>}, {pipeline_mode = #tpu.pipeline_mode<synchronous>, transform_indices = @transform_17, window_bounds = array<i64: 32, 32>}, {pipeline_mode = #tpu.pipeline_mode<synchronous>, transform_indices = @transform_18, window_bounds = array<i64: 1, 32>}, {pipeline_mode = #tpu.pipeline_mode<synchronous>, transform_indices = @transform_19, window_bounds = array<i64: 32, 32>}, {pipeline_mode = #tpu.pipeline_mode<synchronous>, transform_indices = @transform_20, window_bounds = array<i64: 1, 32>}, {pipeline_mode = #tpu.pipeline_mode<synchronous>, transform_indices = @transform_21, window_bounds = array<i64: 32, 32>}, {pipeline_mode = #tpu.pipeline_mode<synchronous>, transform_indices = @transform_22, window_bounds = array<i64: 32, 32>}, {pipeline_mode = #tpu.pipeline_mode<synchronous>, transform_indices = @transform_23, window_bounds = array<i64: 1, 32>}, {pipeline_mode = #tpu.pipeline_mode<synchronous>, transform_indices = @transform_24, window_bounds = array<i64: 1, 32>}, {pipeline_mode = #tpu.pipeline_mode<synchronous>, transform_indices = @transform_25, window_bounds = array<i64: 1, 1>}, {pipeline_mode = #tpu.pipeline_mode<synchronous>, transform_indices = @transform_26, window_bounds = array<i64: 8, 1>}]} {
    %c0 = arith.constant 0 : index
    %c0_0 = arith.constant 0 : index
    %0 = vector.load %arg1[%c0, %c0_0] : memref<128x32xf32, #tpu.memory_space<vmem>>, vector<128x32xf32>
    %c0_1 = arith.constant 0 : index
    %c0_2 = arith.constant 0 : index
    %1 = vector.load %arg8[%c0_1, %c0_2] : memref<32x8xf32, #tpu.memory_space<vmem>>, vector<32x8xf32>
    %cst = arith.constant dense<0.000000e+00> : vector<128x8xf32>
    %2 = tpu.matmul %0, %1, %cst {dimension_numbers = #tpu.dot_dimension_numbers<[1], [0], [0], [1], [0, 0, 1, 1], [], []>} : vector<128x32xf32>, vector<32x8xf32>, vector<128x8xf32> -> vector<128x8xf32>
    %c0_3 = arith.constant 0 : index
    %c0_4 = arith.constant 0 : index
    %3 = vector.load %arg9[%c0_3, %c0_4] : memref<1x8xf32, #tpu.memory_space<vmem>>, vector<1x8xf32>
    %4 = vector.broadcast %3 : vector<1x8xf32> to vector<128x8xf32>
    %5 = arith.addf %2, %4 : vector<128x8xf32>
    %cst_5 = arith.constant 0.000000e+00 : f32
    %6 = vector.broadcast %cst_5 : f32 to vector<128x8xf32>
    %7 = arith.maximumf %5, %6 : vector<128x8xf32>
    %c0_6 = arith.constant 0 : index
    %c0_7 = arith.constant 0 : index
    %8 = vector.load %arg2[%c0_6, %c0_7] : memref<2x128xf32, #tpu.memory_space<vmem>>, vector<2x128xf32>
    %cst_8 = arith.constant dense<0.000000e+00> : vector<2x8xf32>
    %9 = tpu.matmul %8, %7, %cst_8 {dimension_numbers = #tpu.dot_dimension_numbers<[1], [0], [0], [1], [0, 0, 1, 1], [], []>} : vector<2x128xf32>, vector<128x8xf32>, vector<2x8xf32> -> vector<2x8xf32>
    %c0_9 = arith.constant 0 : index
    %c0_10 = arith.constant 0 : index
    %10 = vector.load %arg10[%c0_9, %c0_10] : memref<8x32xf32, #tpu.memory_space<vmem>>, vector<8x32xf32>
    %cst_11 = arith.constant dense<0.000000e+00> : vector<2x32xf32>
    %11 = tpu.matmul %9, %10, %cst_11 {dimension_numbers = #tpu.dot_dimension_numbers<[1], [0], [0], [1], [0, 0, 1, 1], [], []>} : vector<2x8xf32>, vector<8x32xf32>, vector<2x32xf32> -> vector<2x32xf32>
    %c0_12 = arith.constant 0 : index
    %c0_13 = arith.constant 0 : index
    %12 = vector.load %arg11[%c0_12, %c0_13] : memref<1x32xf32, #tpu.memory_space<vmem>>, vector<1x32xf32>
    %13 = vector.broadcast %12 : vector<1x32xf32> to vector<2x32xf32>
    %14 = arith.addf %11, %13 : vector<2x32xf32>
    %cst_14 = arith.constant 0.000000e+00 : f32
    %15 = vector.broadcast %cst_14 : f32 to vector<2x32xf32>
    %16 = arith.maximumf %14, %15 : vector<2x32xf32>
    %c0_15 = arith.constant 0 : index
    %c0_16 = arith.constant 0 : index
    %17 = vector.load %arg12[%c0_15, %c0_16] : memref<32x32xf32, #tpu.memory_space<vmem>>, vector<32x32xf32>
    %cst_17 = arith.constant dense<0.000000e+00> : vector<2x32xf32>
    %18 = tpu.matmul %16, %17, %cst_17 {dimension_numbers = #tpu.dot_dimension_numbers<[1], [0], [0], [1], [0, 0, 1, 1], [], []>} : vector<2x32xf32>, vector<32x32xf32>, vector<2x32xf32> -> vector<2x32xf32>
    %c0_18 = arith.constant 0 : index
    %c0_19 = arith.constant 0 : index
    %19 = vector.load %arg13[%c0_18, %c0_19] : memref<1x32xf32, #tpu.memory_space<vmem>>, vector<1x32xf32>
    %20 = vector.broadcast %19 : vector<1x32xf32> to vector<2x32xf32>
    %21 = arith.addf %18, %20 : vector<2x32xf32>
    %c0_20 = arith.constant 0 : index
    %c0_21 = arith.constant 0 : index
    %22 = vector.load %arg3[%c0_20, %c0_21] : memref<16x32xf32, #tpu.memory_space<vmem>>, vector<16x32xf32>
    %c0_22 = arith.constant 0 : index
    %c0_23 = arith.constant 0 : index
    %23 = vector.load %arg14[%c0_22, %c0_23] : memref<32x32xf32, #tpu.memory_space<vmem>>, vector<32x32xf32>
    %cst_24 = arith.constant dense<0.000000e+00> : vector<16x32xf32>
    %24 = tpu.matmul %22, %23, %cst_24 {dimension_numbers = #tpu.dot_dimension_numbers<[1], [0], [0], [1], [0, 0, 1, 1], [], []>} : vector<16x32xf32>, vector<32x32xf32>, vector<16x32xf32> -> vector<16x32xf32>
    %c0_25 = arith.constant 0 : index
    %c0_26 = arith.constant 0 : index
    %25 = vector.load %arg15[%c0_25, %c0_26] : memref<1x32xf32, #tpu.memory_space<vmem>>, vector<1x32xf32>
    %26 = vector.broadcast %25 : vector<1x32xf32> to vector<16x32xf32>
    %27 = arith.addf %24, %26 : vector<16x32xf32>
    %cst_27 = arith.constant 0.000000e+00 : f32
    %28 = vector.broadcast %cst_27 : f32 to vector<16x32xf32>
    %29 = arith.maximumf %27, %28 : vector<16x32xf32>
    %c0_28 = arith.constant 0 : index
    %c0_29 = arith.constant 0 : index
    %30 = vector.load %arg16[%c0_28, %c0_29] : memref<32x32xf32, #tpu.memory_space<vmem>>, vector<32x32xf32>
    %cst_30 = arith.constant dense<0.000000e+00> : vector<2x32xf32>
    %31 = tpu.matmul %21, %30, %cst_30 {dimension_numbers = #tpu.dot_dimension_numbers<[1], [0], [0], [1], [0, 0, 1, 1], [], []>} : vector<2x32xf32>, vector<32x32xf32>, vector<2x32xf32> -> vector<2x32xf32>
    %c0_31 = arith.constant 0 : index
    %c0_32 = arith.constant 0 : index
    %32 = vector.load %arg17[%c0_31, %c0_32] : memref<1x32xf32, #tpu.memory_space<vmem>>, vector<1x32xf32>
    %33 = vector.broadcast %32 : vector<1x32xf32> to vector<2x32xf32>
    %34 = arith.addf %31, %33 : vector<2x32xf32>
    %cst_33 = arith.constant 0.000000e+00 : f32
    %35 = vector.broadcast %cst_33 : f32 to vector<2x32xf32>
    %36 = arith.maximumf %34, %35 : vector<2x32xf32>
    %c0_34 = arith.constant 0 : index
    %c0_35 = arith.constant 0 : index
    %37 = vector.load %arg4[%c0_34, %c0_35] : memref<16x2xf32, #tpu.memory_space<vmem>>, vector<16x2xf32>
    %cst_36 = arith.constant dense<0.000000e+00> : vector<16x32xf32>
    %38 = tpu.matmul %37, %36, %cst_36 {dimension_numbers = #tpu.dot_dimension_numbers<[1], [0], [0], [1], [0, 0, 1, 1], [], []>} : vector<16x2xf32>, vector<2x32xf32>, vector<16x32xf32> -> vector<16x32xf32>
    %39 = arith.mulf %29, %38 : vector<16x32xf32>
    %cst_37 = arith.constant dense<0.000000e+00> : vector<16xf32>
    %40 = vector.multi_reduction <add>, %39, %cst_37 [1] : vector<16x32xf32> to vector<16xf32>
    %41 = vector.shape_cast %40 : vector<16xf32> to vector<16x1xf32>
    %42 = vector.shape_cast %41 : vector<16x1xf32> to vector<1x16x1xf32>
    %cst_38 = arith.constant dense<0xFF800000> : vector<1xf32>
    %43 = vector.multi_reduction <maximumf>, %42, %cst_38 [1, 2] : vector<1x16x1xf32> to vector<1xf32>
    %44 = vector.shape_cast %43 : vector<1xf32> to vector<1x1x1xf32>
    %45 = vector.extract %44[0, 0, 0] : f32 from vector<1x1x1xf32>
    %46 = vector.broadcast %45 : f32 to vector<16x1xf32>
    %47 = arith.subf %41, %46 : vector<16x1xf32>
    %48 = math.exp %47 : vector<16x1xf32>
    %c0_39 = arith.constant 0 : index
    %c0_40 = arith.constant 0 : index
    %49 = vector.load %arg4[%c0_39, %c0_40] : memref<16x2xf32, #tpu.memory_space<vmem>>, vector<16x2xf32>
    %c0_41 = arith.constant 0 : index
    %c0_42 = arith.constant 0 : index
    %50 = vector.load %arg5[%c0_41, %c0_42] : memref<2x16xf32, #tpu.memory_space<vmem>>, vector<2x16xf32>
    %cst_43 = arith.constant dense<0.000000e+00> : vector<2x1xf32>
    %51 = tpu.matmul %50, %48, %cst_43 {dimension_numbers = #tpu.dot_dimension_numbers<[1], [0], [0], [1], [0, 0, 1, 1], [], []>} : vector<2x16xf32>, vector<16x1xf32>, vector<2x1xf32> -> vector<2x1xf32>
    %cst_44 = arith.constant dense<0.000000e+00> : vector<16x1xf32>
    %52 = tpu.matmul %49, %51, %cst_44 {dimension_numbers = #tpu.dot_dimension_numbers<[1], [0], [0], [1], [0, 0, 1, 1], [], []>} : vector<16x2xf32>, vector<2x1xf32>, vector<16x1xf32> -> vector<16x1xf32>
    %53 = arith.divf %48, %52 : vector<16x1xf32>
    %c0_45 = arith.constant 0 : index
    %c0_46 = arith.constant 0 : index
    %54 = vector.load %arg5[%c0_45, %c0_46] : memref<2x16xf32, #tpu.memory_space<vmem>>, vector<2x16xf32>
    %55 = vector.broadcast %53 : vector<16x1xf32> to vector<16x32xf32>
    %56 = arith.mulf %55, %29 : vector<16x32xf32>
    %cst_47 = arith.constant dense<0.000000e+00> : vector<2x32xf32>
    %57 = tpu.matmul %54, %56, %cst_47 {dimension_numbers = #tpu.dot_dimension_numbers<[1], [0], [0], [1], [0, 0, 1, 1], [], []>} : vector<2x16xf32>, vector<16x32xf32>, vector<2x32xf32> -> vector<2x32xf32>
    %58 = arith.mulf %57, %36 : vector<2x32xf32>
    %c0_48 = arith.constant 0 : index
    %c0_49 = arith.constant 0 : index
    %59 = vector.load %arg18[%c0_48, %c0_49] : memref<32x32xf32, #tpu.memory_space<vmem>>, vector<32x32xf32>
    %cst_50 = arith.constant dense<0.000000e+00> : vector<2x32xf32>
    %60 = tpu.matmul %58, %59, %cst_50 {dimension_numbers = #tpu.dot_dimension_numbers<[1], [0], [0], [1], [0, 0, 1, 1], [], []>} : vector<2x32xf32>, vector<32x32xf32>, vector<2x32xf32> -> vector<2x32xf32>
    %c0_51 = arith.constant 0 : index
    %c0_52 = arith.constant 0 : index
    %61 = vector.load %arg19[%c0_51, %c0_52] : memref<1x32xf32, #tpu.memory_space<vmem>>, vector<1x32xf32>
    %62 = vector.broadcast %61 : vector<1x32xf32> to vector<2x32xf32>
    %63 = arith.addf %60, %62 : vector<2x32xf32>
    %cst_53 = arith.constant 0.000000e+00 : f32
    %64 = vector.broadcast %cst_53 : f32 to vector<2x32xf32>
    %65 = arith.maximumf %63, %64 : vector<2x32xf32>
    %c0_54 = arith.constant 0 : index
    %c0_55 = arith.constant 0 : index
    %66 = vector.load %arg5[%c0_54, %c0_55] : memref<2x16xf32, #tpu.memory_space<vmem>>, vector<2x16xf32>
    %cst_56 = arith.constant dense<0.000000e+00> : vector<2x32xf32>
    %67 = tpu.matmul %66, %22, %cst_56 {dimension_numbers = #tpu.dot_dimension_numbers<[1], [0], [0], [1], [0, 0, 1, 1], [], []>} : vector<2x16xf32>, vector<16x32xf32>, vector<2x32xf32> -> vector<2x32xf32>
    %cst_57 = arith.constant 8.000000e+00 : f32
    %68 = vector.broadcast %cst_57 : f32 to vector<2x32xf32>
    %69 = arith.mulf %68, %65 : vector<2x32xf32>
    %70 = arith.addf %67, %69 : vector<2x32xf32>
    %c0_58 = arith.constant 0 : index
    %c0_59 = arith.constant 0 : index
    %71 = vector.load %arg20[%c0_58, %c0_59] : memref<32x32xf32, #tpu.memory_space<vmem>>, vector<32x32xf32>
    %cst_60 = arith.constant dense<0.000000e+00> : vector<2x32xf32>
    %72 = tpu.matmul %70, %71, %cst_60 {dimension_numbers = #tpu.dot_dimension_numbers<[1], [0], [0], [1], [0, 0, 1, 1], [], []>} : vector<2x32xf32>, vector<32x32xf32>, vector<2x32xf32> -> vector<2x32xf32>
    %c0_61 = arith.constant 0 : index
    %c0_62 = arith.constant 0 : index
    %73 = vector.load %arg21[%c0_61, %c0_62] : memref<1x32xf32, #tpu.memory_space<vmem>>, vector<1x32xf32>
    %74 = vector.broadcast %73 : vector<1x32xf32> to vector<2x32xf32>
    %75 = arith.addf %72, %74 : vector<2x32xf32>
    %cst_63 = arith.constant 0.000000e+00 : f32
    %76 = vector.broadcast %cst_63 : f32 to vector<2x32xf32>
    %77 = arith.maximumf %75, %76 : vector<2x32xf32>
    %c0_64 = arith.constant 0 : index
    %c0_65 = arith.constant 0 : index
    %78 = vector.load %arg22[%c0_64, %c0_65] : memref<32x32xf32, #tpu.memory_space<vmem>>, vector<32x32xf32>
    %cst_66 = arith.constant dense<0.000000e+00> : vector<2x32xf32>
    %79 = tpu.matmul %77, %78, %cst_66 {dimension_numbers = #tpu.dot_dimension_numbers<[1], [0], [0], [1], [0, 0, 1, 1], [], []>} : vector<2x32xf32>, vector<32x32xf32>, vector<2x32xf32> -> vector<2x32xf32>
    %c0_67 = arith.constant 0 : index
    %c0_68 = arith.constant 0 : index
    %80 = vector.load %arg7[%c0_67, %c0_68] : memref<8x2xf32, #tpu.memory_space<vmem>>, vector<8x2xf32>
    %cst_69 = arith.constant dense<0.000000e+00> : vector<8x32xf32>
    %81 = tpu.matmul %80, %79, %cst_69 {dimension_numbers = #tpu.dot_dimension_numbers<[1], [0], [0], [1], [0, 0, 1, 1], [], []>} : vector<8x2xf32>, vector<2x32xf32>, vector<8x32xf32> -> vector<8x32xf32>
    %c0_70 = arith.constant 0 : index
    %c0_71 = arith.constant 0 : index
    %82 = vector.load %arg6[%c0_70, %c0_71] : memref<8x32xf32, #tpu.memory_space<vmem>>, vector<8x32xf32>
    %c0_72 = arith.constant 0 : index
    %c0_73 = arith.constant 0 : index
    %83 = vector.load %arg23[%c0_72, %c0_73] : memref<32x32xf32, #tpu.memory_space<vmem>>, vector<32x32xf32>
    %cst_74 = arith.constant dense<0.000000e+00> : vector<8x32xf32>
    %84 = tpu.matmul %82, %83, %cst_74 {dimension_numbers = #tpu.dot_dimension_numbers<[1], [0], [0], [1], [0, 0, 1, 1], [], []>} : vector<8x32xf32>, vector<32x32xf32>, vector<8x32xf32> -> vector<8x32xf32>
    %85 = arith.addf %81, %84 : vector<8x32xf32>
    %c0_75 = arith.constant 0 : index
    %c0_76 = arith.constant 0 : index
    %86 = vector.load %arg24[%c0_75, %c0_76] : memref<1x32xf32, #tpu.memory_space<vmem>>, vector<1x32xf32>
    %87 = vector.broadcast %86 : vector<1x32xf32> to vector<8x32xf32>
    %88 = arith.addf %85, %87 : vector<8x32xf32>
    %cst_77 = arith.constant 0.000000e+00 : f32
    %89 = vector.broadcast %cst_77 : f32 to vector<8x32xf32>
    %90 = arith.maximumf %88, %89 : vector<8x32xf32>
    %c0_78 = arith.constant 0 : index
    %c0_79 = arith.constant 0 : index
    %91 = vector.load %arg25[%c0_78, %c0_79] : memref<1x32xf32, #tpu.memory_space<vmem>>, vector<1x32xf32>
    %92 = vector.broadcast %91 : vector<1x32xf32> to vector<8x32xf32>
    %93 = arith.mulf %90, %92 : vector<8x32xf32>
    %cst_80 = arith.constant dense<0.000000e+00> : vector<8xf32>
    %94 = vector.multi_reduction <add>, %93, %cst_80 [1] : vector<8x32xf32> to vector<8xf32>
    %95 = vector.shape_cast %94 : vector<8xf32> to vector<8x1xf32>
    %c0_81 = arith.constant 0 : index
    %c0_82 = arith.constant 0 : index
    %96 = vector.load %arg26[%c0_81, %c0_82] : memref<1x1xf32, #tpu.memory_space<vmem>>, vector<1x1xf32>
    %97 = vector.broadcast %96 : vector<1x1xf32> to vector<8x1xf32>
    %98 = arith.addf %95, %97 : vector<8x1xf32>
    %c0_83 = arith.constant 0 : index
    %c0_84 = arith.constant 0 : index
    %99 = vector.load %arg27[%c0_83, %c0_84] : memref<8x1xf32, #tpu.memory_space<vmem>>, vector<8x1xf32>
    tpu.vector_store %arg27[%c0_83, %c0_84], %98 {strides = array<i32>} : memref<8x1xf32, #tpu.memory_space<vmem>>, vector<8x1xf32>,
    return
  }
  func.func @transform_0(%arg0: i32) -> (i32, i32) {
    %c0_i32 = arith.constant 0 : i32
    %c0_i32_0 = arith.constant 0 : i32
    %c0_i32_1 = arith.constant 0 : i32
    return %c0_i32, %c0_i32_0 : i32, i32
  }
  func.func @transform_1(%arg0: i32) -> (i32, i32) {
    %c0_i32 = arith.constant 0 : i32
    %c0_i32_0 = arith.constant 0 : i32
    %c0_i32_1 = arith.constant 0 : i32
    return %c0_i32, %c0_i32_0 : i32, i32
  }
  func.func @transform_2(%arg0: i32) -> (i32, i32) {
    %c0_i32 = arith.constant 0 : i32
    %c0_i32_0 = arith.constant 0 : i32
    %c0_i32_1 = arith.constant 0 : i32
    return %c0_i32, %c0_i32_0 : i32, i32
  }
  func.func @transform_3(%arg0: i32) -> (i32, i32) {
    %c0_i32 = arith.constant 0 : i32
    %c0_i32_0 = arith.constant 0 : i32
    %c0_i32_1 = arith.constant 0 : i32
    return %c0_i32, %c0_i32_0 : i32, i32
  }
  func.func @transform_4(%arg0: i32) -> (i32, i32) {
    %c0_i32 = arith.constant 0 : i32
    %c0_i32_0 = arith.constant 0 : i32
    %c0_i32_1 = arith.constant 0 : i32
    return %c0_i32, %c0_i32_0 : i32, i32
  }
  func.func @transform_5(%arg0: i32) -> (i32, i32) {
    %c0_i32 = arith.constant 0 : i32
    %c0_i32_0 = arith.constant 0 : i32
    %c0_i32_1 = arith.constant 0 : i32
    return %c0_i32, %c0_i32_0 : i32, i32
  }
  func.func @transform_6(%arg0: i32) -> (i32, i32) {
    %c0_i32 = arith.constant 0 : i32
    %c0_i32_0 = arith.constant 0 : i32
    %c0_i32_1 = arith.constant 0 : i32
    return %c0_i32, %c0_i32_0 : i32, i32
  }
  func.func @transform_7(%arg0: i32) -> (i32, i32) {
    %c0_i32 = arith.constant 0 : i32
    %c0_i32_0 = arith.constant 0 : i32
    %c0_i32_1 = arith.constant 0 : i32
    return %c0_i32, %c0_i32_0 : i32, i32
  }
  func.func @transform_8(%arg0: i32) -> (i32, i32) {
    %c0_i32 = arith.constant 0 : i32
    %c0_i32_0 = arith.constant 0 : i32
    %c0_i32_1 = arith.constant 0 : i32
    return %c0_i32, %c0_i32_0 : i32, i32
  }
  func.func @transform_9(%arg0: i32) -> (i32, i32) {
    %c0_i32 = arith.constant 0 : i32
    %c0_i32_0 = arith.constant 0 : i32
    %c0_i32_1 = arith.constant 0 : i32
    return %c0_i32, %c0_i32_0 : i32, i32
  }
  func.func @transform_10(%arg0: i32) -> (i32, i32) {
    %c0_i32 = arith.constant 0 : i32
    %c0_i32_0 = arith.constant 0 : i32
    %c0_i32_1 = arith.constant 0 : i32
    return %c0_i32, %c0_i32_0 : i32, i32
  }
  func.func @transform_11(%arg0: i32) -> (i32, i32) {
    %c0_i32 = arith.constant 0 : i32
    %c0_i32_0 = arith.constant 0 : i32
    %c0_i32_1 = arith.constant 0 : i32
    return %c0_i32, %c0_i32_0 : i32, i32
  }
  func.func @transform_12(%arg0: i32) -> (i32, i32) {
    %c0_i32 = arith.constant 0 : i32
    %c0_i32_0 = arith.constant 0 : i32
    %c0_i32_1 = arith.constant 0 : i32
    return %c0_i32, %c0_i32_0 : i32, i32
  }
  func.func @transform_13(%arg0: i32) -> (i32, i32) {
    %c0_i32 = arith.constant 0 : i32
    %c0_i32_0 = arith.constant 0 : i32
    %c0_i32_1 = arith.constant 0 : i32
    return %c0_i32, %c0_i32_0 : i32, i32
  }
  func.func @transform_14(%arg0: i32) -> (i32, i32) {
    %c0_i32 = arith.constant 0 : i32
    %c0_i32_0 = arith.constant 0 : i32
    %c0_i32_1 = arith.constant 0 : i32
    return %c0_i32, %c0_i32_0 : i32, i32
  }
  func.func @transform_15(%arg0: i32) -> (i32, i32) {
    %c0_i32 = arith.constant 0 : i32
    %c0_i32_0 = arith.constant 0 : i32
    %c0_i32_1 = arith.constant 0 : i32
    return %c0_i32, %c0_i32_0 : i32, i32
  }
  func.func @transform_16(%arg0: i32) -> (i32, i32) {
    %c0_i32 = arith.constant 0 : i32
    %c0_i32_0 = arith.constant 0 : i32
    %c0_i32_1 = arith.constant 0 : i32
    return %c0_i32, %c0_i32_0 : i32, i32
  }
  func.func @transform_17(%arg0: i32) -> (i32, i32) {
    %c0_i32 = arith.constant 0 : i32
    %c0_i32_0 = arith.constant 0 : i32
    %c0_i32_1 = arith.constant 0 : i32
    return %c0_i32, %c0_i32_0 : i32, i32
  }
  func.func @transform_18(%arg0: i32) -> (i32, i32) {
    %c0_i32 = arith.constant 0 : i32
    %c0_i32_0 = arith.constant 0 : i32
    %c0_i32_1 = arith.constant 0 : i32
    return %c0_i32, %c0_i32_0 : i32, i32
  }
  func.func @transform_19(%arg0: i32) -> (i32, i32) {
    %c0_i32 = arith.constant 0 : i32
    %c0_i32_0 = arith.constant 0 : i32
    %c0_i32_1 = arith.constant 0 : i32
    return %c0_i32, %c0_i32_0 : i32, i32
  }
  func.func @transform_20(%arg0: i32) -> (i32, i32) {
    %c0_i32 = arith.constant 0 : i32
    %c0_i32_0 = arith.constant 0 : i32
    %c0_i32_1 = arith.constant 0 : i32
    return %c0_i32, %c0_i32_0 : i32, i32
  }
  func.func @transform_21(%arg0: i32) -> (i32, i32) {
    %c0_i32 = arith.constant 0 : i32
    %c0_i32_0 = arith.constant 0 : i32
    %c0_i32_1 = arith.constant 0 : i32
    return %c0_i32, %c0_i32_0 : i32, i32
  }
  func.func @transform_22(%arg0: i32) -> (i32, i32) {
    %c0_i32 = arith.constant 0 : i32
    %c0_i32_0 = arith.constant 0 : i32
    %c0_i32_1 = arith.constant 0 : i32
    return %c0_i32, %c0_i32_0 : i32, i32
  }
  func.func @transform_23(%arg0: i32) -> (i32, i32) {
    %c0_i32 = arith.constant 0 : i32
    %c0_i32_0 = arith.constant 0 : i32
    %c0_i32_1 = arith.constant 0 : i32
    return %c0_i32, %c0_i32_0 : i32, i32
  }
  func.func @transform_24(%arg0: i32) -> (i32, i32) {
    %c0_i32 = arith.constant 0 : i32
    %c0_i32_0 = arith.constant 0 : i32
    %c0_i32_1 = arith.constant 0 : i32
    return %c0_i32, %c0_i32_0 : i32, i32
  }
  func.func @transform_25(%arg0: i32) -> (i32, i32) {
    %c0_i32 = arith.constant 0 : i32
    %c0_i32_0 = arith.constant 0 : i32
    %c0_i32_1 = arith.constant 0 : i32
    return %c0_i32, %c0_i32_0 : i32, i32
  }
  func.func @transform_26(%arg0: i32) -> (i32, i32) {
    %c0_i32 = arith.constant 0 : i32
    %c0_i32_0 = arith.constant 0 : i32
    %c0_i32_1 = arith.constant 0 : i32
    return %c0_i32, %c0_i32_0 : i32, i32
  }
}

</mosaic_0001>

<llo_original>
// kernel: net_forward.1
$region0: #{net_forward.1}
  #allocation0 [shape = 'u32[]', space=smem, size = 0x4, offset = 0x4, fixed_abs, tag = 'smem constant byte address 0x4 - core index']
  #allocation1 [shape = 'u32[144,128]{1,0:T(1,128)}', space=vmem, size = 0x12000, scoped, tag = 'internal scratch']
  #allocation2 [shape = 'f32[1,1]{1,0:T(1,128)S(1)}', space=vmem, size = 0x200, scoped, tag = 'scoped memory for net_forward.1']
  %s0 = inlined_call_operand.vmem [shape: f32[128,32], index: 0, kind: input, shape index: {}]
  %s1 = inlined_call_operand.vmem [shape: f32[2,128], index: 1, kind: input, shape index: {}]
  %s2 = inlined_call_operand.vmem [shape: f32[16,32], index: 2, kind: input, shape index: {}]
  %s3 = inlined_call_operand.vmem [shape: f32[16,2], index: 3, kind: input, shape index: {}]
  %s4 = inlined_call_operand.vmem [shape: f32[2,16], index: 4, kind: input, shape index: {}]
  %s5 = inlined_call_operand.vmem [shape: f32[8,32], index: 5, kind: input, shape index: {}]
  %s6 = inlined_call_operand.vmem [shape: f32[8,2], index: 6, kind: input, shape index: {}]
  %s7 = inlined_call_operand.vmem [shape: f32[32,8], index: 7, kind: input, shape index: {}]
  %s8 = inlined_call_operand.vmem [shape: f32[1,8], index: 8, kind: input, shape index: {}]
  %s9 = inlined_call_operand.vmem [shape: f32[8,32], index: 9, kind: input, shape index: {}]
  %s10 = inlined_call_operand.vmem [shape: f32[1,32], index: 10, kind: input, shape index: {}]
  %s11 = inlined_call_operand.vmem [shape: f32[32,32], index: 11, kind: input, shape index: {}]
  %s12 = inlined_call_operand.vmem [shape: f32[1,32], index: 12, kind: input, shape index: {}]
  %s13 = inlined_call_operand.vmem [shape: f32[32,32], index: 13, kind: input, shape index: {}]
  %s14 = inlined_call_operand.vmem [shape: f32[1,32], index: 14, kind: input, shape index: {}]
  %s15 = inlined_call_operand.vmem [shape: f32[32,32], index: 15, kind: input, shape index: {}]
  %s16 = inlined_call_operand.vmem [shape: f32[1,32], index: 16, kind: input, shape index: {}]
  %s17 = inlined_call_operand.vmem [shape: f32[32,32], index: 17, kind: input, shape index: {}]
  %s18 = inlined_call_operand.vmem [shape: f32[1,32], index: 18, kind: input, shape index: {}]
  %s19 = inlined_call_operand.vmem [shape: f32[32,32], index: 19, kind: input, shape index: {}]
  %s20 = inlined_call_operand.vmem [shape: f32[1,32], index: 20, kind: input, shape index: {}]
  %s21 = inlined_call_operand.vmem [shape: f32[32,32], index: 21, kind: input, shape index: {}]
  %s22 = inlined_call_operand.vmem [shape: f32[32,32], index: 22, kind: input, shape index: {}]
  %s23 = inlined_call_operand.vmem [shape: f32[1,32], index: 23, kind: input, shape index: {}]
  %s24 = inlined_call_operand.vmem [shape: f32[1,32], index: 24, kind: input, shape index: {}]
  %s25 = inlined_call_operand.<no memory space> [shape: f32[1,1], index: 25, kind: input, shape index: {}]
  %s26 = inlined_call_operand.vmem [shape: f32[8,1], index: 26, kind: output, shape index: {}]
  %s27 = sld [smem:[#allocation0]]
  $region114: #{net_forward.1} parent=0
    _
  %s29 = ssub.s32 1, %s27
  %s30 = scalar_select 0, %s29, %s27
  %v31 = vstv %s25
  %32 = vst [vmem:[#allocation2] sm:$0x1] %v31
  // Predicated region
  $region2: #{net_forward.1} parent=0 // pred_check
    _
  $region3: #{net_forward.1} parent=0 // pred_check_branch
    %34 = sbr.rel (0) target = $region5
  $region4: #{net_forward.1} parent=0 // pred_region
    _
  $region5: #{net_forward.1} parent=0 // pred_fallthru
    _
  // Predicated region
  $region6: #{net_forward.1} parent=0 // pred_check
    _
  $region7: #{net_forward.1} parent=0 // pred_check_branch
    %36 = sbr.rel (0) target = $region9
  $region8: #{net_forward.1} parent=0 // pred_region
    _
  $region9: #{net_forward.1} parent=0 // pred_fallthru
    _
  // Predicated region
  $region10: #{net_forward.1} parent=0 // pred_check
    _
  $region11: #{net_forward.1} parent=0 // pred_check_branch
    %38 = sbr.rel (0) target = $region13
  $region12: #{net_forward.1} parent=0 // pred_region
    _
  $region13: #{net_forward.1} parent=0 // pred_fallthru
    _
  // Predicated region
  $region14: #{net_forward.1} parent=0 // pred_check
    _
  $region15: #{net_forward.1} parent=0 // pred_check_branch
    %40 = sbr.rel (0) target = $region17
  $region16: #{net_forward.1} parent=0 // pred_region
    _
  $region17: #{net_forward.1} parent=0 // pred_fallthru
    _
  // Predicated region
  $region18: #{net_forward.1} parent=0 // pred_check
    _
  $region19: #{net_forward.1} parent=0 // pred_check_branch
    %42 = sbr.rel (0) target = $region21
  $region20: #{net_forward.1} parent=0 // pred_region
    _
  $region21: #{net_forward.1} parent=0 // pred_fallthru
    _
  // Predicated region
  $region22: #{net_forward.1} parent=0 // pred_check
    _
  $region23: #{net_forward.1} parent=0 // pred_check_branch
    %44 = sbr.rel (0) target = $region25
  $region24: #{net_forward.1} parent=0 // pred_region
    _
  $region25: #{net_forward.1} parent=0 // pred_fallthru
    _
  // Predicated region
  $region26: #{net_forward.1} parent=0 // pred_check
    _
  $region27: #{net_forward.1} parent=0 // pred_check_branch
    %46 = sbr.rel (0) target = $region29
  $region28: #{net_forward.1} parent=0 // pred_region
    _
  $region29: #{net_forward.1} parent=0 // pred_fallthru
    _
  // Predicated region
  $region30: #{net_forward.1} parent=0 // pred_check
    _
  $region31: #{net_forward.1} parent=0 // pred_check_branch
    %48 = sbr.rel (0) target = $region33
  $region32: #{net_forward.1} parent=0 // pred_region
    _
  $region33: #{net_forward.1} parent=0 // pred_fallthru
    _
  // Predicated region
  $region34: #{net_forward.1} parent=0 // pred_check
    _
  $region35: #{net_forward.1} parent=0 // pred_check_branch
    %50 = sbr.rel (0) target = $region37
  $region36: #{net_forward.1} parent=0 // pred_region
    _
  $region37: #{net_forward.1} parent=0 // pred_fallthru
    _
  // Predicated region
  $region38: #{net_forward.1} parent=0 // pred_check
    _
  $region39: #{net_forward.1} parent=0 // pred_check_branch
    %52 = sbr.rel (0) target = $region41
  $region40: #{net_forward.1} parent=0 // pred_region
    _
  $region41: #{net_forward.1} parent=0 // pred_fallthru
    _
  // Predicated region
  $region42: #{net_forward.1} parent=0 // pred_check
    _
  $region43: #{net_forward.1} parent=0 // pred_check_branch
    %54 = sbr.rel (0) target = $region45
  $region44: #{net_forward.1} parent=0 // pred_region
    _
  $region45: #{net_forward.1} parent=0 // pred_fallthru
    _
  // Predicated region
  $region46: #{net_forward.1} parent=0 // pred_check
    _
  $region47: #{net_forward.1} parent=0 // pred_check_branch
    %56 = sbr.rel (0) target = $region49
  $region48: #{net_forward.1} parent=0 // pred_region
    _
  $region49: #{net_forward.1} parent=0 // pred_fallthru
    _
  // Predicated region
  $region50: #{net_forward.1} parent=0 // pred_check
    _
  $region51: #{net_forward.1} parent=0 // pred_check_branch
    %58 = sbr.rel (0) target = $region53
  $region52: #{net_forward.1} parent=0 // pred_region
    _
  $region53: #{net_forward.1} parent=0 // pred_fallthru
    _
  // Predicated region
  $region54: #{net_forward.1} parent=0 // pred_check
    _
  $region55: #{net_forward.1} parent=0 // pred_check_branch
    %60 = sbr.rel (0) target = $region57
  $region56: #{net_forward.1} parent=0 // pred_region
    _
  $region57: #{net_forward.1} parent=0 // pred_fallthru
    _
  // Predicated region
  $region58: #{net_forward.1} parent=0 // pred_check
    _
  $region59: #{net_forward.1} parent=0 // pred_check_branch
    %62 = sbr.rel (0) target = $region61
  $region60: #{net_forward.1} parent=0 // pred_region
    _
  $region61: #{net_forward.1} parent=0 // pred_fallthru
    _
  // Predicated region
  $region62: #{net_forward.1} parent=0 // pred_check
    _
  $region63: #{net_forward.1} parent=0 // pred_check_branch
    %64 = sbr.rel (0) target = $region65
  $region64: #{net_forward.1} parent=0 // pred_region
    _
  $region65: #{net_forward.1} parent=0 // pred_fallthru
    _
  // Predicated region
  $region66: #{net_forward.1} parent=0 // pred_check
    _
  $region67: #{net_forward.1} parent=0 // pred_check_branch
    %66 = sbr.rel (0) target = $region69
  $region68: #{net_forward.1} parent=0 // pred_region
    _
  $region69: #{net_forward.1} parent=0 // pred_fallthru
    _
  // Predicated region
  $region70: #{net_forward.1} parent=0 // pred_check
    _
  $region71: #{net_forward.1} parent=0 // pred_check_branch
    %68 = sbr.rel (0) target = $region73
  $region72: #{net_forward.1} parent=0 // pred_region
    _
  $region73: #{net_forward.1} parent=0 // pred_fallthru
    _
  // Predicated region
  $region74: #{net_forward.1} parent=0 // pred_check
    _
  $region75: #{net_forward.1} parent=0 // pred_check_branch
    %70 = sbr.rel (0) target = $region77
  $region76: #{net_forward.1} parent=0 // pred_region
    _
  $region77: #{net_forward.1} parent=0 // pred_fallthru
    _
  // Predicated region
  $region78: #{net_forward.1} parent=0 // pred_check
    _
  $region79: #{net_forward.1} parent=0 // pred_check_branch
    %72 = sbr.rel (0) target = $region81
  $region80: #{net_forward.1} parent=0 // pred_region
    _
  $region81: #{net_forward.1} parent=0 // pred_fallthru
    _
  // Predicated region
  $region82: #{net_forward.1} parent=0 // pred_check
    _
  $region83: #{net_forward.1} parent=0 // pred_check_branch
    %74 = sbr.rel (0) target = $region85
  $region84: #{net_forward.1} parent=0 // pred_region
    _
  $region85: #{net_forward.1} parent=0 // pred_fallthru
    _
  // Predicated region
  $region86: #{net_forward.1} parent=0 // pred_check
    _
  $region87: #{net_forward.1} parent=0 // pred_check_branch
    %76 = sbr.rel (0) target = $region89
  $region88: #{net_forward.1} parent=0 // pred_region
    _
  $region89: #{net_forward.1} parent=0 // pred_fallthru
    _
  // Predicated region
  $region90: #{net_forward.1} parent=0 // pred_check
    _
  $region91: #{net_forward.1} parent=0 // pred_check_branch
    %78 = sbr.rel (0) target = $region93
  $region92: #{net_forward.1} parent=0 // pred_region
    _
  $region93: #{net_forward.1} parent=0 // pred_fallthru
    _
  // Predicated region
  $region94: #{net_forward.1} parent=0 // pred_check
    _
  $region95: #{net_forward.1} parent=0 // pred_check_branch
    %80 = sbr.rel (0) target = $region97
  $region96: #{net_forward.1} parent=0 // pred_region
    _
  $region97: #{net_forward.1} parent=0 // pred_fallthru
    _
  // Predicated region
  $region98: #{net_forward.1} parent=0 // pred_check
    _
  $region99: #{net_forward.1} parent=0 // pred_check_branch
    %82 = sbr.rel (0) target = $region101
  $region100: #{net_forward.1} parent=0 // pred_region
    _
  $region101: #{net_forward.1} parent=0 // pred_fallthru
    _
  // Predicated region
  $region102: #{net_forward.1} parent=0 // pred_check
    _
  $region103: #{net_forward.1} parent=0 // pred_check_branch
    %84 = sbr.rel (0) target = $region105
  $region104: #{net_forward.1} parent=0 // pred_region
    _
  $region105: #{net_forward.1} parent=0 // pred_fallthru
    _
  %v85 = vld [vmem:[%s0] sm:$0xff]
  %v86 = vld [vmem:[%s0 + $0x8] sm:$0xff]
  %v87 = vld [vmem:[%s0 + $0x10] sm:$0xff]
  %v88 = vld [vmem:[%s0 + $0x18] sm:$0xff]
  %v89 = vld [vmem:[%s0 + $0x20] sm:$0xff]
  %v90 = vld [vmem:[%s0 + $0x28] sm:$0xff]
  %v91 = vld [vmem:[%s0 + $0x30] sm:$0xff]
  %v92 = vld [vmem:[%s0 + $0x38] sm:$0xff]
  %v93 = vld [vmem:[%s0 + $0x40] sm:$0xff]
  %v94 = vld [vmem:[%s0 + $0x48] sm:$0xff]
  %v95 = vld [vmem:[%s0 + $0x50] sm:$0xff]
  %v96 = vld [vmem:[%s0 + $0x58] sm:$0xff]
  %v97 = vld [vmem:[%s0 + $0x60] sm:$0xff]
  %v98 = vld [vmem:[%s0 + $0x68] sm:$0xff]
  %v99 = vld [vmem:[%s0 + $0x70] sm:$0xff]
  %v100 = vld [vmem:[%s0 + $0x78] sm:$0xff]
  %v101 = vld [vmem:[%s7] sm:$0xff]
  %v102 = vld [vmem:[%s7 + $0x8] sm:$0xff]
  %v103 = vld [vmem:[%s7 + $0x10] sm:$0xff]
  %v104 = vld [vmem:[%s7 + $0x18] sm:$0xff]
  %v105 = vld [vmem:[%s8] sm:$0x1]
  %v107 = vlaneseq
  %v108 = vshrl.u32 %v107, 7
  %v109 = vsub.s32 0, %v108
  %v110 = vrot.slane %v105, %v109
  %vm112 = vcmask 261120
  %v114 = vsel %vm112, %v85, 0
  %v117 = vsel %vm112, %v86, 0
  %v120 = vsel %vm112, %v87, 0
  %v123 = vsel %vm112, %v88, 0
  %v126 = vsel %vm112, %v89, 0
  %v129 = vsel %vm112, %v90, 0
  %v132 = vsel %vm112, %v91, 0
  %v135 = vsel %vm112, %v92, 0
  %v138 = vsel %vm112, %v93, 0
  %v141 = vsel %vm112, %v94, 0
  %v144 = vsel %vm112, %v95, 0
  %v147 = vsel %vm112, %v96, 0
  %v150 = vsel %vm112, %v97, 0
  %v153 = vsel %vm112, %v98, 0
  %v156 = vsel %vm112, %v99, 0
  %v159 = vsel %vm112, %v100, 0
  %161 = vmatprep.subr.mxu0 0.0
  %162 = vmatpush1.msra.mxu0 %v101
  %163 = vmatprep.subr.mxu0 0.0
  %164 = vmatpush1.msra.mxu0 %v102
  %165 = vmatprep.subr.mxu0 0.0
  %166 = vmatpush1.msra.mxu0 %v103
  %167 = vmatprep.subr.mxu0 0.0
  %168 = vmatpush1.msra.mxu0 %v104
  %169 = vmatprep.subr.mxu0 0.0
  %170 = vmatpush1.msra.mxu0 0.0
  %171 = vmatprep.subr.mxu0 0.0
  %172 = vmatpush1.msra.mxu0 0.0
  %173 = vmatprep.subr.mxu0 0.0
  %174 = vmatpush1.msra.mxu0 0.0
  %175 = vmatprep.subr.mxu0 0.0
  %176 = vmatpush1.msra.mxu0 0.0
  %177 = vmatprep.subr.mxu0 0.0
  %178 = vmatpush1.msra.mxu0 0.0
  %179 = vmatprep.subr.mxu0 0.0
  %180 = vmatpush1.msra.mxu0 0.0
  %181 = vmatprep.subr.mxu0 0.0
  %182 = vmatpush1.msra.mxu0 0.0
  %183 = vmatprep.subr.mxu0 0.0
  %184 = vmatpush1.msra.mxu0 0.0
  %185 = vmatprep.subr.mxu0 0.0
  %186 = vmatpush1.msra.mxu0 0.0
  %187 = vmatprep.subr.mxu0 0.0
  %188 = vmatpush1.msra.mxu0 0.0
  %189 = vmatprep.subr.mxu0 0.0
  %190 = vmatpush1.msra.mxu0 0.0
  %191 = vmatprep.subr.mxu0 0.0
  %192 = vmatpush1.msra.mxu0 0.0
  %193 = vmatprep.subr.mxu0 0.0
  %194 = vmatpush1.msra.mxu0 0.0
  %195 = vmatprep.subr.mxu0 0.0
  %196 = vmatpush1.msra.mxu0 0.0
  %197 = vmatprep.subr.mxu0 0.0
  %198 = vmatpush1.msra.mxu0 0.0
  %199 = vmatprep.subr.mxu0 0.0
  %200 = vmatpush1.msra.mxu0 0.0
  %201 = vmatprep.subr.mxu0 0.0
  %202 = vmatpush1.msra.mxu0 0.0
  %203 = vmatprep.subr.mxu0 0.0
  %204 = vmatpush1.msra.mxu0 0.0
  %205 = vmatprep.subr.mxu0 0.0
  %206 = vmatpush1.msra.mxu0 0.0
  %207 = vmatprep.subr.mxu0 0.0
  %208 = vmatpush1.msra.mxu0 0.0
  %209 = vmatprep.subr.mxu0 0.0
  %210 = vmatpush1.msra.mxu0 0.0
  %211 = vmatprep.subr.mxu0 0.0
  %212 = vmatpush1.msra.mxu0 0.0
  %213 = vmatprep.subr.mxu0 0.0
  %214 = vmatpush1.msra.mxu0 0.0
  %215 = vmatprep.subr.mxu0 0.0
  %216 = vmatpush1.msra.mxu0 0.0
  %217 = vmatprep.subr.mxu0 0.0
  %218 = vmatpush1.msra.mxu0 0.0
  %219 = vmatprep.subr.mxu0 0.0
  %220 = vmatpush1.msra.mxu0 0.0
  %221 = vmatprep.subr.mxu0 0.0
  %222 = vmatpush1.msra.mxu0 0.0
  %223 = vmatprep.subr.mxu0 0.0
  %224 = vmatpush1.msra.mxu0 0.0
  %225 = vmatprep.mubr.f32.mxu0 0.0
  %226 = vmatmul.mubr.f32.gmra.mrb[0].mxu0 %v114
  %v227 = vpop.f32.mrb[0].mxu0
  %v228 = vadd.f32 %v110, %v227
  %v229 = vpop.f32.mrb[0].mxu0
  %230 = vmatprep.mubr.f32.mxu0 0.0
  %231 = vmatmul.mubr.f32.gmra.mrb[0].mxu0 %v117
  %v232 = vpop.f32.mrb[0].mxu0
  %v233 = vadd.f32 %v110, %v232
  %v234 = vpop.f32.mrb[0].mxu0
  %235 = vmatprep.mubr.f32.mxu0 0.0
  %236 = vmatmul.mubr.f32.gmra.mrb[0].mxu0 %v120
  %v237 = vpop.f32.mrb[0].mxu0
  %v238 = vadd.f32 %v110, %v237
  %v239 = vpop.f32.mrb[0].mxu0
  %240 = vmatprep.mubr.f32.mxu0 0.0
  %241 = vmatmul.mubr.f32.gmra.mrb[0].mxu0 %v123
  %v242 = vpop.f32.mrb[0].mxu0
  %v243 = vadd.f32 %v110, %v242
  %v244 = vpop.f32.mrb[0].mxu0
  %245 = vmatprep.mubr.f32.mxu0 0.0
  %246 = vmatmul.mubr.f32.gmra.mrb[0].mxu0 %v126
  %v247 = vpop.f32.mrb[0].mxu0
  %v248 = vadd.f32 %v110, %v247
  %v249 = vpop.f32.mrb[0].mxu0
  %250 = vmatprep.mubr.f32.mxu0 0.0
  %251 = vmatmul.mubr.f32.gmra.mrb[0].mxu0 %v129
  %v252 = vpop.f32.mrb[0].mxu0
  %v253 = vadd.f32 %v110, %v252
  %v254 = vpop.f32.mrb[0].mxu0
  %255 = vmatprep.mubr.f32.mxu0 0.0
  %256 = vmatmul.mubr.f32.gmra.mrb[0].mxu0 %v132
  %v257 = vpop.f32.mrb[0].mxu0
  %v258 = vadd.f32 %v110, %v257
  %v259 = vpop.f32.mrb[0].mxu0
  %260 = vmatprep.mubr.f32.mxu0 0.0
  %261 = vmatmul.mubr.f32.gmra.mrb[0].mxu0 %v135
  %v262 = vpop.f32.mrb[0].mxu0
  %v263 = vadd.f32 %v110, %v262
  %v264 = vpop.f32.mrb[0].mxu0
  %265 = vmatprep.mubr.f32.mxu0 0.0
  %266 = vmatmul.mubr.f32.gmra.mrb[0].mxu0 %v138
  %v267 = vpop.f32.mrb[0].mxu0
  %v268 = vadd.f32 %v110, %v267
  %v269 = vpop.f32.mrb[0].mxu0
  %270 = vmatprep.mubr.f32.mxu0 0.0
  %271 = vmatmul.mubr.f32.gmra.mrb[0].mxu0 %v141
  %v272 = vpop.f32.mrb[0].mxu0
  %v273 = vadd.f32 %v110, %v272
  %v274 = vpop.f32.mrb[0].mxu0
  %275 = vmatprep.mubr.f32.mxu0 0.0
  %276 = vmatmul.mubr.f32.gmra.mrb[0].mxu0 %v144
  %v277 = vpop.f32.mrb[0].mxu0
  %v278 = vadd.f32 %v110, %v277
  %v279 = vpop.f32.mrb[0].mxu0
  %280 = vmatprep.mubr.f32.mxu0 0.0
  %281 = vmatmul.mubr.f32.gmra.mrb[0].mxu0 %v147
  %v282 = vpop.f32.mrb[0].mxu0
  %v283 = vadd.f32 %v110, %v282
  %v284 = vpop.f32.mrb[0].mxu0
  %285 = vmatprep.mubr.f32.mxu0 0.0
  %286 = vmatmul.mubr.f32.gmra.mrb[0].mxu0 %v150
  %v287 = vpop.f32.mrb[0].mxu0
  %v288 = vadd.f32 %v110, %v287
  %v289 = vpop.f32.mrb[0].mxu0
  %290 = vmatprep.mubr.f32.mxu0 0.0
  %291 = vmatmul.mubr.f32.gmra.mrb[0].mxu0 %v153
  %v292 = vpop.f32.mrb[0].mxu0
  %v293 = vadd.f32 %v110, %v292
  %v294 = vpop.f32.mrb[0].mxu0
  %295 = vmatprep.mubr.f32.mxu0 0.0
  %296 = vmatmul.mubr.f32.gmra.mrb[0].mxu0 %v156
  %v297 = vpop.f32.mrb[0].mxu0
  %v298 = vadd.f32 %v110, %v297
  %v299 = vpop.f32.mrb[0].mxu0
  %300 = vmatprep.mubr.f32.mxu0 0.0
  %301 = vmatmul.mubr.f32.gmra.mrb[0].mxu0 %v159
  %v302 = vpop.f32.mrb[0].mxu0
  %v303 = vadd.f32 %v110, %v302
  %v304 = vpop.f32.mrb[0].mxu0
  %305 = vdwg.mxu0
  %v306 = vmax.f32 %v228, 0.0
  %v307 = vmax.f32 %v233, 0.0
  %v308 = vmax.f32 %v238, 0.0
  %v309 = vmax.f32 %v243, 0.0
  %v310 = vmax.f32 %v248, 0.0
  %v311 = vmax.f32 %v253, 0.0
  %v312 = vmax.f32 %v258, 0.0
  %v313 = vmax.f32 %v263, 0.0
  %v314 = vmax.f32 %v268, 0.0
  %v315 = vmax.f32 %v273, 0.0
  %v316 = vmax.f32 %v278, 0.0
  %v317 = vmax.f32 %v283, 0.0
  %v318 = vmax.f32 %v288, 0.0
  %v319 = vmax.f32 %v293, 0.0
  %v320 = vmax.f32 %v298, 0.0
  %v321 = vmax.f32 %v303, 0.0
  %v322 = vld [vmem:[%s1] sm:$0x3]
  %323 = vmatprep.subr.mxu0 0.0
  %324 = vmatpush1.msra.mxu0 %v306
  %325 = vmatprep.subr.mxu0 0.0
  %326 = vmatpush1.msra.mxu0 %v307
  %327 = vmatprep.subr.mxu0 0.0
  %328 = vmatpush1.msra.mxu0 %v308
  %329 = vmatprep.subr.mxu0 0.0
  %330 = vmatpush1.msra.mxu0 %v309
  %331 = vmatprep.subr.mxu0 0.0
  %332 = vmatpush1.msra.mxu0 %v310
  %333 = vmatprep.subr.mxu0 0.0
  %334 = vmatpush1.msra.mxu0 %v311
  %335 = vmatprep.subr.mxu0 0.0
  %336 = vmatpush1.msra.mxu0 %v312
  %337 = vmatprep.subr.mxu0 0.0
  %338 = vmatpush1.msra.mxu0 %v313
  %339 = vmatprep.subr.mxu0 0.0
  %340 = vmatpush1.msra.mxu0 %v314
  %341 = vmatprep.subr.mxu0 0.0
  %342 = vmatpush1.msra.mxu0 %v315
  %343 = vmatprep.subr.mxu0 0.0
  %344 = vmatpush1.msra.mxu0 %v316
  %345 = vmatprep.subr.mxu0 0.0
  %346 = vmatpush1.msra.mxu0 %v317
  %347 = vmatprep.subr.mxu0 0.0
  %348 = vmatpush1.msra.mxu0 %v318
  %349 = vmatprep.subr.mxu0 0.0
  %350 = vmatpush1.msra.mxu0 %v319
  %351 = vmatprep.subr.mxu0 0.0
  %352 = vmatpush1.msra.mxu0 %v320
  %353 = vmatprep.subr.mxu0 0.0
  %354 = vmatpush1.msra.mxu0 %v321
  %355 = vmatprep.subr.mxu0 0.0
  %356 = vmatpush1.msra.mxu0 0.0
  %357 = vmatprep.subr.mxu0 0.0
  %358 = vmatpush1.msra.mxu0 0.0
  %359 = vmatprep.subr.mxu0 0.0
  %360 = vmatpush1.msra.mxu0 0.0
  %361 = vmatprep.subr.mxu0 0.0
  %362 = vmatpush1.msra.mxu0 0.0
  %363 = vmatprep.subr.mxu0 0.0
  %364 = vmatpush1.msra.mxu0 0.0
  %365 = vmatprep.subr.mxu0 0.0
  %366 = vmatpush1.msra.mxu0 0.0
  %367 = vmatprep.subr.mxu0 0.0
  %368 = vmatpush1.msra.mxu0 0.0
  %369 = vmatprep.subr.mxu0 0.0
  %370 = vmatpush1.msra.mxu0 0.0
  %371 = vmatprep.subr.mxu0 0.0
  %372 = vmatpush1.msra.mxu0 0.0
  %373 = vmatprep.subr.mxu0 0.0
  %374 = vmatpush1.msra.mxu0 0.0
  %375 = vmatprep.subr.mxu0 0.0
  %376 = vmatpush1.msra.mxu0 0.0
  %377 = vmatprep.subr.mxu0 0.0
  %378 = vmatpush1.msra.mxu0 0.0
  %379 = vmatprep.subr.mxu0 0.0
  %380 = vmatpush1.msra.mxu0 0.0
  %381 = vmatprep.subr.mxu0 0.0
  %382 = vmatpush1.msra.mxu0 0.0
  %383 = vmatprep.subr.mxu0 0.0
  %384 = vmatpush1.msra.mxu0 0.0
  %385 = vmatprep.subr.mxu0 0.0
  %386 = vmatpush1.msra.mxu0 0.0
  %387 = vmatprep.mubr.f32.mxu0 0.0
  %388 = vmatmul.mubr.f32.gmra.mrb[0].mxu0 %v322
  %v389 = vpop.f32.mrb[0].mxu0
  %v390 = vadd.f32 0.0, %v389
  %v391 = vpop.f32.mrb[0].mxu0
  %392 = vdwg.mxu0
  %v393 = vld [vmem:[%s9] sm:$0xff]
  %v394 = vld [vmem:[%s10] sm:$0x1]
  %v396 = vlaneseq
  %v397 = vshrl.u32 %v396, 7
  %v398 = vsub.s32 0, %v397
  %v399 = vrot.slane %v394, %v398
  %vm401 = vcmask 64512
  %v403 = vsel %vm401, %v390, 0
  %405 = vmatprep.subr.mxu0 0.0
  %406 = vmatpush1.msra.mxu0 %v393
  %407 = vmatprep.subr.mxu0 0.0
  %408 = vmatpush1.msra.mxu0 0.0
  %409 = vmatprep.subr.mxu0 0.0
  %410 = vmatpush1.msra.mxu0 0.0
  %411 = vmatprep.subr.mxu0 0.0
  %412 = vmatpush1.msra.mxu0 0.0
  %413 = vmatprep.subr.mxu0 0.0
  %414 = vmatpush1.msra.mxu0 0.0
  %415 = vmatprep.subr.mxu0 0.0
  %416 = vmatpush1.msra.mxu0 0.0
  %417 = vmatprep.subr.mxu0 0.0
  %418 = vmatpush1.msra.mxu0 0.0
  %419 = vmatprep.subr.mxu0 0.0
  %420 = vmatpush1.msra.mxu0 0.0
  %421 = vmatprep.subr.mxu0 0.0
  %422 = vmatpush1.msra.mxu0 0.0
  %423 = vmatprep.subr.mxu0 0.0
  %424 = vmatpush1.msra.mxu0 0.0
  %425 = vmatprep.subr.mxu0 0.0
  %426 = vmatpush1.msra.mxu0 0.0
  %427 = vmatprep.subr.mxu0 0.0
  %428 = vmatpush1.msra.mxu0 0.0
  %429 = vmatprep.subr.mxu0 0.0
  %430 = vmatpush1.msra.mxu0 0.0
  %431 = vmatprep.subr.mxu0 0.0
  %432 = vmatpush1.msra.mxu0 0.0
  %433 = vmatprep.subr.mxu0 0.0
  %434 = vmatpush1.msra.mxu0 0.0
  %435 = vmatprep.subr.mxu0 0.0
  %436 = vmatpush1.msra.mxu0 0.0
  %437 = vmatprep.subr.mxu0 0.0
  %438 = vmatpush1.msra.mxu0 0.0
  %439 = vmatprep.subr.mxu0 0.0
  %440 = vmatpush1.msra.mxu0 0.0
  %441 = vmatprep.subr.mxu0 0.0
  %442 = vmatpush1.msra.mxu0 0.0
  %443 = vmatprep.subr.mxu0 0.0
  %444 = vmatpush1.msra.mxu0 0.0
  %445 = vmatprep.subr.mxu0 0.0
  %446 = vmatpush1.msra.mxu0 0.0
  %447 = vmatprep.subr.mxu0 0.0
  %448 = vmatpush1.msra.mxu0 0.0
  %449 = vmatprep.subr.mxu0 0.0
  %450 = vmatpush1.msra.mxu0 0.0
  %451 = vmatprep.subr.mxu0 0.0
  %452 = vmatpush1.msra.mxu0 0.0
  %453 = vmatprep.subr.mxu0 0.0
  %454 = vmatpush1.msra.mxu0 0.0
  %455 = vmatprep.subr.mxu0 0.0
  %456 = vmatpush1.msra.mxu0 0.0
  %457 = vmatprep.subr.mxu0 0.0
  %458 = vmatpush1.msra.mxu0 0.0
  %459 = vmatprep.subr.mxu0 0.0
  %460 = vmatpush1.msra.mxu0 0.0
  %461 = vmatprep.subr.mxu0 0.0
  %462 = vmatpush1.msra.mxu0 0.0
  %463 = vmatprep.subr.mxu0 0.0
  %464 = vmatpush1.msra.mxu0 0.0
  %465 = vmatprep.subr.mxu0 0.0
  %466 = vmatpush1.msra.mxu0 0.0
  %467 = vmatprep.subr.mxu0 0.0
  %468 = vmatpush1.msra.mxu0 0.0
  %469 = vmatprep.mubr.f32.mxu0 0.0
  %470 = vmatmul.mubr.f32.gmra.mrb[0].mxu0 %v403
  %v471 = vpop.f32.mrb[0].mxu0
  %v472 = vadd.f32 %v399, %v471
  %v473 = vpop.f32.mrb[0].mxu0
  %474 = vdwg.mxu0
  %v475 = vmax.f32 %v472, 0.0
  %v476 = vld [vmem:[%s11] sm:$0xff]
  %v477 = vld [vmem:[%s11 + $0x8] sm:$0xff]
  %v478 = vld [vmem:[%s11 + $0x10] sm:$0xff]
  %v479 = vld [vmem:[%s11 + $0x18] sm:$0xff]
  %v480 = vld [vmem:[%s12] sm:$0x1]
  %v482 = vlaneseq
  %v483 = vshrl.u32 %v482, 7
  %v484 = vsub.s32 0, %v483
  %v485 = vrot.slane %v480, %v484
  %v488 = vsel %vm112, %v475, 0
  %490 = vmatprep.subr.mxu0 0.0
  %491 = vmatpush1.msra.mxu0 %v476
  %492 = vmatprep.subr.mxu0 0.0
  %493 = vmatpush1.msra.mxu0 %v477
  %494 = vmatprep.subr.mxu0 0.0
  %495 = vmatpush1.msra.mxu0 %v478
  %496 = vmatprep.subr.mxu0 0.0
  %497 = vmatpush1.msra.mxu0 %v479
  %498 = vmatprep.subr.mxu0 0.0
  %499 = vmatpush1.msra.mxu0 0.0
  %500 = vmatprep.subr.mxu0 0.0
  %501 = vmatpush1.msra.mxu0 0.0
  %502 = vmatprep.subr.mxu0 0.0
  %503 = vmatpush1.msra.mxu0 0.0
  %504 = vmatprep.subr.mxu0 0.0
  %505 = vmatpush1.msra.mxu0 0.0
  %506 = vmatprep.subr.mxu0 0.0
  %507 = vmatpush1.msra.mxu0 0.0
  %508 = vmatprep.subr.mxu0 0.0
  %509 = vmatpush1.msra.mxu0 0.0
  %510 = vmatprep.subr.mxu0 0.0
  %511 = vmatpush1.msra.mxu0 0.0
  %512 = vmatprep.subr.mxu0 0.0
  %513 = vmatpush1.msra.mxu0 0.0
  %514 = vmatprep.subr.mxu0 0.0
  %515 = vmatpush1.msra.mxu0 0.0
  %516 = vmatprep.subr.mxu0 0.0
  %517 = vmatpush1.msra.mxu0 0.0
  %518 = vmatprep.subr.mxu0 0.0
  %519 = vmatpush1.msra.mxu0 0.0
  %520 = vmatprep.subr.mxu0 0.0
  %521 = vmatpush1.msra.mxu0 0.0
  %522 = vmatprep.subr.mxu0 0.0
  %523 = vmatpush1.msra.mxu0 0.0
  %524 = vmatprep.subr.mxu0 0.0
  %525 = vmatpush1.msra.mxu0 0.0
  %526 = vmatprep.subr.mxu0 0.0
  %527 = vmatpush1.msra.mxu0 0.0
  %528 = vmatprep.subr.mxu0 0.0
  %529 = vmatpush1.msra.mxu0 0.0
  %530 = vmatprep.subr.mxu0 0.0
  %531 = vmatpush1.msra.mxu0 0.0
  %532 = vmatprep.subr.mxu0 0.0
  %533 = vmatpush1.msra.mxu0 0.0
  %534 = vmatprep.subr.mxu0 0.0
  %535 = vmatpush1.msra.mxu0 0.0
  %536 = vmatprep.subr.mxu0 0.0
  %537 = vmatpush1.msra.mxu0 0.0
  %538 = vmatprep.subr.mxu0 0.0
  %539 = vmatpush1.msra.mxu0 0.0
  %540 = vmatprep.subr.mxu0 0.0
  %541 = vmatpush1.msra.mxu0 0.0
  %542 = vmatprep.subr.mxu0 0.0
  %543 = vmatpush1.msra.mxu0 0.0
  %544 = vmatprep.subr.mxu0 0.0
  %545 = vmatpush1.msra.mxu0 0.0
  %546 = vmatprep.subr.mxu0 0.0
  %547 = vmatpush1.msra.mxu0 0.0
  %548 = vmatprep.subr.mxu0 0.0
  %549 = vmatpush1.msra.mxu0 0.0
  %550 = vmatprep.subr.mxu0 0.0
  %551 = vmatpush1.msra.mxu0 0.0
  %552 = vmatprep.subr.mxu0 0.0
  %553 = vmatpush1.msra.mxu0 0.0
  %554 = vmatprep.mubr.f32.mxu0 0.0
  %555 = vmatmul.mubr.f32.gmra.mrb[0].mxu0 %v488
  %v556 = vpop.f32.mrb[0].mxu0
  %v557 = vadd.f32 %v485, %v556
  %v558 = vpop.f32.mrb[0].mxu0
  %559 = vdwg.mxu0
  %v560 = vld [vmem:[%s2] sm:$0xff]
  %v561 = vld [vmem:[%s2 + $0x8] sm:$0xff]
  %v562 = vld [vmem:[%s13] sm:$0xff]
  %v563 = vld [vmem:[%s13 + $0x8] sm:$0xff]
  %v564 = vld [vmem:[%s13 + $0x10] sm:$0xff]
  %v565 = vld [vmem:[%s13 + $0x18] sm:$0xff]
  %v566 = vld [vmem:[%s14] sm:$0x1]
  %v568 = vlaneseq
  %v569 = vshrl.u32 %v568, 7
  %v570 = vsub.s32 0, %v569
  %v571 = vrot.slane %v566, %v570
  %v574 = vsel %vm112, %v560, 0
  %v577 = vsel %vm112, %v561, 0
  %579 = vmatprep.subr.mxu0 0.0
  %580 = vmatpush1.msra.mxu0 %v562
  %581 = vmatprep.subr.mxu0 0.0
  %582 = vmatpush1.msra.mxu0 %v563
  %583 = vmatprep.subr.mxu0 0.0
  %584 = vmatpush1.msra.mxu0 %v564
  %585 = vmatprep.subr.mxu0 0.0
  %586 = vmatpush1.msra.mxu0 %v565
  %587 = vmatprep.subr.mxu0 0.0
  %588 = vmatpush1.msra.mxu0 0.0
  %589 = vmatprep.subr.mxu0 0.0
  %590 = vmatpush1.msra.mxu0 0.0
  %591 = vmatprep.subr.mxu0 0.0
  %592 = vmatpush1.msra.mxu0 0.0
  %593 = vmatprep.subr.mxu0 0.0
  %594 = vmatpush1.msra.mxu0 0.0
  %595 = vmatprep.subr.mxu0 0.0
  %596 = vmatpush1.msra.mxu0 0.0
  %597 = vmatprep.subr.mxu0 0.0
  %598 = vmatpush1.msra.mxu0 0.0
  %599 = vmatprep.subr.mxu0 0.0
  %600 = vmatpush1.msra.mxu0 0.0
  %601 = vmatprep.subr.mxu0 0.0
  %602 = vmatpush1.msra.mxu0 0.0
  %603 = vmatprep.subr.mxu0 0.0
  %604 = vmatpush1.msra.mxu0 0.0
  %605 = vmatprep.subr.mxu0 0.0
  %606 = vmatpush1.msra.mxu0 0.0
  %607 = vmatprep.subr.mxu0 0.0
  %608 = vmatpush1.msra.mxu0 0.0
  %609 = vmatprep.subr.mxu0 0.0
  %610 = vmatpush1.msra.mxu0 0.0
  %611 = vmatprep.subr.mxu0 0.0
  %612 = vmatpush1.msra.mxu0 0.0
  %613 = vmatprep.subr.mxu0 0.0
  %614 = vmatpush1.msra.mxu0 0.0
  %615 = vmatprep.subr.mxu0 0.0
  %616 = vmatpush1.msra.mxu0 0.0
  %617 = vmatprep.subr.mxu0 0.0
  %618 = vmatpush1.msra.mxu0 0.0
  %619 = vmatprep.subr.mxu0 0.0
  %620 = vmatpush1.msra.mxu0 0.0
  %621 = vmatprep.subr.mxu0 0.0
  %622 = vmatpush1.msra.mxu0 0.0
  %623 = vmatprep.subr.mxu0 0.0
  %624 = vmatpush1.msra.mxu0 0.0
  %625 = vmatprep.subr.mxu0 0.0
  %626 = vmatpush1.msra.mxu0 0.0
  %627 = vmatprep.subr.mxu0 0.0
  %628 = vmatpush1.msra.mxu0 0.0
  %629 = vmatprep.subr.mxu0 0.0
  %630 = vmatpush1.msra.mxu0 0.0
  %631 = vmatprep.subr.mxu0 0.0
  %632 = vmatpush1.msra.mxu0 0.0
  %633 = vmatprep.subr.mxu0 0.0
  %634 = vmatpush1.msra.mxu0 0.0
  %635 = vmatprep.subr.mxu0 0.0
  %636 = vmatpush1.msra.mxu0 0.0
  %637 = vmatprep.subr.mxu0 0.0
  %638 = vmatpush1.msra.mxu0 0.0
  %639 = vmatprep.subr.mxu0 0.0
  %640 = vmatpush1.msra.mxu0 0.0
  %641 = vmatprep.subr.mxu0 0.0
  %642 = vmatpush1.msra.mxu0 0.0
  %643 = vmatprep.mubr.f32.mxu0 0.0
  %644 = vmatmul.mubr.f32.gmra.mrb[0].mxu0 %v574
  %v645 = vpop.f32.mrb[0].mxu0
  %v646 = vadd.f32 %v571, %v645
  %v647 = vpop.f32.mrb[0].mxu0
  %648 = vmatprep.mubr.f32.mxu0 0.0
  %649 = vmatmul.mubr.f32.gmra.mrb[0].mxu0 %v577
  %v650 = vpop.f32.mrb[0].mxu0
  %v651 = vadd.f32 %v571, %v650
  %v652 = vpop.f32.mrb[0].mxu0
  %653 = vdwg.mxu0
  %v654 = vmax.f32 %v646, 0.0
  %v655 = vmax.f32 %v651, 0.0
  %v656 = vld [vmem:[%s15] sm:$0xff]
  %v657 = vld [vmem:[%s15 + $0x8] sm:$0xff]
  %v658 = vld [vmem:[%s15 + $0x10] sm:$0xff]
  %v659 = vld [vmem:[%s15 + $0x18] sm:$0xff]
  %v660 = vld [vmem:[%s16] sm:$0x1]
  %v662 = vlaneseq
  %v663 = vshrl.u32 %v662, 7
  %v664 = vsub.s32 0, %v663
  %v665 = vrot.slane %v660, %v664
  %v668 = vsel %vm112, %v557, 0
  %670 = vmatprep.subr.mxu0 0.0
  %671 = vmatpush1.msra.mxu0 %v656
  %672 = vmatprep.subr.mxu0 0.0
  %673 = vmatpush1.msra.mxu0 %v657
  %674 = vmatprep.subr.mxu0 0.0
  %675 = vmatpush1.msra.mxu0 %v658
  %676 = vmatprep.subr.mxu0 0.0
  %677 = vmatpush1.msra.mxu0 %v659
  %678 = vmatprep.subr.mxu0 0.0
  %679 = vmatpush1.msra.mxu0 0.0
  %680 = vmatprep.subr.mxu0 0.0
  %681 = vmatpush1.msra.mxu0 0.0
  %682 = vmatprep.subr.mxu0 0.0
  %683 = vmatpush1.msra.mxu0 0.0
  %684 = vmatprep.subr.mxu0 0.0
  %685 = vmatpush1.msra.mxu0 0.0
  %686 = vmatprep.subr.mxu0 0.0
  %687 = vmatpush1.msra.mxu0 0.0
  %688 = vmatprep.subr.mxu0 0.0
  %689 = vmatpush1.msra.mxu0 0.0
  %690 = vmatprep.subr.mxu0 0.0
  %691 = vmatpush1.msra.mxu0 0.0
  %692 = vmatprep.subr.mxu0 0.0
  %693 = vmatpush1.msra.mxu0 0.0
  %694 = vmatprep.subr.mxu0 0.0
  %695 = vmatpush1.msra.mxu0 0.0
  %696 = vmatprep.subr.mxu0 0.0
  %697 = vmatpush1.msra.mxu0 0.0
  %698 = vmatprep.subr.mxu0 0.0
  %699 = vmatpush1.msra.mxu0 0.0
  %700 = vmatprep.subr.mxu0 0.0
  %701 = vmatpush1.msra.mxu0 0.0
  %702 = vmatprep.subr.mxu0 0.0
  %703 = vmatpush1.msra.mxu0 0.0
  %704 = vmatprep.subr.mxu0 0.0
  %705 = vmatpush1.msra.mxu0 0.0
  %706 = vmatprep.subr.mxu0 0.0
  %707 = vmatpush1.msra.mxu0 0.0
  %708 = vmatprep.subr.mxu0 0.0
  %709 = vmatpush1.msra.mxu0 0.0
  %710 = vmatprep.subr.mxu0 0.0
  %711 = vmatpush1.msra.mxu0 0.0
  %712 = vmatprep.subr.mxu0 0.0
  %713 = vmatpush1.msra.mxu0 0.0
  %714 = vmatprep.subr.mxu0 0.0
  %715 = vmatpush1.msra.mxu0 0.0
  %716 = vmatprep.subr.mxu0 0.0
  %717 = vmatpush1.msra.mxu0 0.0
  %718 = vmatprep.subr.mxu0 0.0
  %719 = vmatpush1.msra.mxu0 0.0
  %720 = vmatprep.subr.mxu0 0.0
  %721 = vmatpush1.msra.mxu0 0.0
  %722 = vmatprep.subr.mxu0 0.0
  %723 = vmatpush1.msra.mxu0 0.0
  %724 = vmatprep.subr.mxu0 0.0
  %725 = vmatpush1.msra.mxu0 0.0
  %726 = vmatprep.subr.mxu0 0.0
  %727 = vmatpush1.msra.mxu0 0.0
  %728 = vmatprep.subr.mxu0 0.0
  %729 = vmatpush1.msra.mxu0 0.0
  %730 = vmatprep.subr.mxu0 0.0
  %731 = vmatpush1.msra.mxu0 0.0
  %732 = vmatprep.subr.mxu0 0.0
  %733 = vmatpush1.msra.mxu0 0.0
  %734 = vmatprep.mubr.f32.mxu0 0.0
  %735 = vmatmul.mubr.f32.gmra.mrb[0].mxu0 %v668
  %v736 = vpop.f32.mrb[0].mxu0
  %v737 = vadd.f32 %v665, %v736
  %v738 = vpop.f32.mrb[0].mxu0
  %739 = vdwg.mxu0
  %v740 = vmax.f32 %v737, 0.0
  %v741 = vld [vmem:[%s3] sm:$0xff]
  %v742 = vld [vmem:[%s3 + $0x8] sm:$0xff]
  %vm743 = vcmask 15360
  %v745 = vsel %vm743, %v741, 0
  %v748 = vsel %vm743, %v742, 0
  %vm750 = vcmask 1041408
  %v752 = vsel %vm750, %v740, 0
  %754 = vmatprep.subr.mxu0 0.0
  %755 = vmatpush1.msra.mxu0 %v752
  %756 = vmatprep.subr.mxu0 0.0
  %757 = vmatpush1.msra.mxu0 0.0
  %758 = vmatprep.subr.mxu0 0.0
  %759 = vmatpush1.msra.mxu0 0.0
  %760 = vmatprep.subr.mxu0 0.0
  %761 = vmatpush1.msra.mxu0 0.0
  %762 = vmatprep.subr.mxu0 0.0
  %763 = vmatpush1.msra.mxu0 0.0
  %764 = vmatprep.subr.mxu0 0.0
  %765 = vmatpush1.msra.mxu0 0.0
  %766 = vmatprep.subr.mxu0 0.0
  %767 = vmatpush1.msra.mxu0 0.0
  %768 = vmatprep.subr.mxu0 0.0
  %769 = vmatpush1.msra.mxu0 0.0
  %770 = vmatprep.subr.mxu0 0.0
  %771 = vmatpush1.msra.mxu0 0.0
  %772 = vmatprep.subr.mxu0 0.0
  %773 = vmatpush1.msra.mxu0 0.0
  %774 = vmatprep.subr.mxu0 0.0
  %775 = vmatpush1.msra.mxu0 0.0
  %776 = vmatprep.subr.mxu0 0.0
  %777 = vmatpush1.msra.mxu0 0.0
  %778 = vmatprep.subr.mxu0 0.0
  %779 = vmatpush1.msra.mxu0 0.0
  %780 = vmatprep.subr.mxu0 0.0
  %781 = vmatpush1.msra.mxu0 0.0
  %782 = vmatprep.subr.mxu0 0.0
  %783 = vmatpush1.msra.mxu0 0.0
  %784 = vmatprep.subr.mxu0 0.0
  %785 = vmatpush1.msra.mxu0 0.0
  %786 = vmatprep.subr.mxu0 0.0
  %787 = vmatpush1.msra.mxu0 0.0
  %788 = vmatprep.subr.mxu0 0.0
  %789 = vmatpush1.msra.mxu0 0.0
  %790 = vmatprep.subr.mxu0 0.0
  %791 = vmatpush1.msra.mxu0 0.0
  %792 = vmatprep.subr.mxu0 0.0
  %793 = vmatpush1.msra.mxu0 0.0
  %794 = vmatprep.subr.mxu0 0.0
  %795 = vmatpush1.msra.mxu0 0.0
  %796 = vmatprep.subr.mxu0 0.0
  %797 = vmatpush1.msra.mxu0 0.0
  %798 = vmatprep.subr.mxu0 0.0
  %799 = vmatpush1.msra.mxu0 0.0
  %800 = vmatprep.subr.mxu0 0.0
  %801 = vmatpush1.msra.mxu0 0.0
  %802 = vmatprep.subr.mxu0 0.0
  %803 = vmatpush1.msra.mxu0 0.0
  %804 = vmatprep.subr.mxu0 0.0
  %805 = vmatpush1.msra.mxu0 0.0
  %806 = vmatprep.subr.mxu0 0.0
  %807 = vmatpush1.msra.mxu0 0.0
  %808 = vmatprep.subr.mxu0 0.0
  %809 = vmatpush1.msra.mxu0 0.0
  %810 = vmatprep.subr.mxu0 0.0
  %811 = vmatpush1.msra.mxu0 0.0
  %812 = vmatprep.subr.mxu0 0.0
  %813 = vmatpush1.msra.mxu0 0.0
  %814 = vmatprep.subr.mxu0 0.0
  %815 = vmatpush1.msra.mxu0 0.0
  %816 = vmatprep.subr.mxu0 0.0
  %817 = vmatpush1.msra.mxu0 0.0
  %818 = vmatprep.mubr.f32.mxu0 0.0
  %819 = vmatmul.mubr.f32.gmra.mrb[0].mxu0 %v745
  %v820 = vpop.f32.mrb[0].mxu0
  %v821 = vadd.f32 0.0, %v820
  %v822 = vpop.f32.mrb[0].mxu0
  %823 = vmatprep.mubr.f32.mxu0 0.0
  %824 = vmatmul.mubr.f32.gmra.mrb[0].mxu0 %v748
  %v825 = vpop.f32.mrb[0].mxu0
  %v826 = vadd.f32 0.0, %v825
  %v827 = vpop.f32.mrb[0].mxu0
  %828 = vdwg.mxu0
  %v829 = vmul.f32 %v654, %v821
  %v830 = vmul.f32 %v655, %v826
  %v831 = vsel %vm112, %v829, 0.0
  %832 = vadd.xlane.f32.xlu0 %v831
  %v833 = vpop.xlane.xlu0 %832
  %v834 = vsel %vm112, %v830, 0.0
  %835 = vadd.xlane.f32.xlu0 %v834
  %v836 = vpop.xlane.xlu0 %835
  %v837 = vmax.f32 %v833, %v836
  %v838 = vrot.slane %v837, 4
  %v839 = vmax.f32 %v837, %v838
  %v840 = vrot.slane %v839, 2
  %v841 = vmax.f32 %v839, %v840
  %v842 = vrot.slane %v841, 1
  %v843 = vmax.f32 %v841, %v842
  %s844 = vtos %v843
  %v845 = vstv %s844
  %v846 = vsub.f32 %v833, %v845
  %v847 = vsub.f32 %v836, %v845
  %v848 = vmul.f32 %v846, 1.442695
  %v849 = vpow.pop %v848
  %v850 = vmul.f32 %v847, 1.442695
  %v851 = vpow.pop %v850
  %v852 = vld [vmem:[%s4] sm:$0x3]
  %vm853 = vcmask 130048
  %v855 = vsel %vm853, %v852, 0
  %857 = vmatprep.subr.mxu0 0.0
  %858 = vmatpush1.msra.mxu0 %v849
  %859 = vmatprep.subr.mxu0 0.0
  %860 = vmatpush1.msra.mxu0 %v851
  %861 = vmatprep.subr.mxu0 0.0
  %862 = vmatpush1.msra.mxu0 0.0
  %863 = vmatprep.subr.mxu0 0.0
  %864 = vmatpush1.msra.mxu0 0.0
  %865 = vmatprep.subr.mxu0 0.0
  %866 = vmatpush1.msra.mxu0 0.0
  %867 = vmatprep.subr.mxu0 0.0
  %868 = vmatpush1.msra.mxu0 0.0
  %869 = vmatprep.subr.mxu0 0.0
  %870 = vmatpush1.msra.mxu0 0.0
  %871 = vmatprep.subr.mxu0 0.0
  %872 = vmatpush1.msra.mxu0 0.0
  %873 = vmatprep.subr.mxu0 0.0
  %874 = vmatpush1.msra.mxu0 0.0
  %875 = vmatprep.subr.mxu0 0.0
  %876 = vmatpush1.msra.mxu0 0.0
  %877 = vmatprep.subr.mxu0 0.0
  %878 = vmatpush1.msra.mxu0 0.0
  %879 = vmatprep.subr.mxu0 0.0
  %880 = vmatpush1.msra.mxu0 0.0
  %881 = vmatprep.subr.mxu0 0.0
  %882 = vmatpush1.msra.mxu0 0.0
  %883 = vmatprep.subr.mxu0 0.0
  %884 = vmatpush1.msra.mxu0 0.0
  %885 = vmatprep.subr.mxu0 0.0
  %886 = vmatpush1.msra.mxu0 0.0
  %887 = vmatprep.subr.mxu0 0.0
  %888 = vmatpush1.msra.mxu0 0.0
  %889 = vmatprep.subr.mxu0 0.0
  %890 = vmatpush1.msra.mxu0 0.0
  %891 = vmatprep.subr.mxu0 0.0
  %892 = vmatpush1.msra.mxu0 0.0
  %893 = vmatprep.subr.mxu0 0.0
  %894 = vmatpush1.msra.mxu0 0.0
  %895 = vmatprep.subr.mxu0 0.0
  %896 = vmatpush1.msra.mxu0 0.0
  %897 = vmatprep.subr.mxu0 0.0
  %898 = vmatpush1.msra.mxu0 0.0
  %899 = vmatprep.subr.mxu0 0.0
  %900 = vmatpush1.msra.mxu0 0.0
  %901 = vmatprep.subr.mxu0 0.0
  %902 = vmatpush1.msra.mxu0 0.0
  %903 = vmatprep.subr.mxu0 0.0
  %904 = vmatpush1.msra.mxu0 0.0
  %905 = vmatprep.subr.mxu0 0.0
  %906 = vmatpush1.msra.mxu0 0.0
  %907 = vmatprep.subr.mxu0 0.0
  %908 = vmatpush1.msra.mxu0 0.0
  %909 = vmatprep.subr.mxu0 0.0
  %910 = vmatpush1.msra.mxu0 0.0
  %911 = vmatprep.subr.mxu0 0.0
  %912 = vmatpush1.msra.mxu0 0.0
  %913 = vmatprep.subr.mxu0 0.0
  %914 = vmatpush1.msra.mxu0 0.0
  %915 = vmatprep.subr.mxu0 0.0
  %916 = vmatpush1.msra.mxu0 0.0
  %917 = vmatprep.subr.mxu0 0.0
  %918 = vmatpush1.msra.mxu0 0.0
  %919 = vmatprep.subr.mxu0 0.0
  %920 = vmatpush1.msra.mxu0 0.0
  %921 = vmatprep.mubr.f32.mxu0 0.0
  %922 = vmatmul.mubr.f32.gmra.mrb[0].mxu0 %v855
  %v923 = vpop.f32.mrb[0].mxu0
  %v924 = vadd.f32 0.0, %v923
  %v925 = vpop.f32.mrb[0].mxu0
  %926 = vdwg.mxu0
  %v928 = vsel %vm750, %v924, 0
  %930 = vmatprep.subr.mxu0 0.0
  %931 = vmatpush1.msra.mxu0 %v928
  %932 = vmatprep.subr.mxu0 0.0
  %933 = vmatpush1.msra.mxu0 0.0
  %934 = vmatprep.subr.mxu0 0.0
  %935 = vmatpush1.msra.mxu0 0.0
  %936 = vmatprep.subr.mxu0 0.0
  %937 = vmatpush1.msra.mxu0 0.0
  %938 = vmatprep.subr.mxu0 0.0
  %939 = vmatpush1.msra.mxu0 0.0
  %940 = vmatprep.subr.mxu0 0.0
  %941 = vmatpush1.msra.mxu0 0.0
  %942 = vmatprep.subr.mxu0 0.0
  %943 = vmatpush1.msra.mxu0 0.0
  %944 = vmatprep.subr.mxu0 0.0
  %945 = vmatpush1.msra.mxu0 0.0
  %946 = vmatprep.subr.mxu0 0.0
  %947 = vmatpush1.msra.mxu0 0.0
  %948 = vmatprep.subr.mxu0 0.0
  %949 = vmatpush1.msra.mxu0 0.0
  %950 = vmatprep.subr.mxu0 0.0
  %951 = vmatpush1.msra.mxu0 0.0
  %952 = vmatprep.subr.mxu0 0.0
  %953 = vmatpush1.msra.mxu0 0.0
  %954 = vmatprep.subr.mxu0 0.0
  %955 = vmatpush1.msra.mxu0 0.0
  %956 = vmatprep.subr.mxu0 0.0
  %957 = vmatpush1.msra.mxu0 0.0
  %958 = vmatprep.subr.mxu0 0.0
  %959 = vmatpush1.msra.mxu0 0.0
  %960 = vmatprep.subr.mxu0 0.0
  %961 = vmatpush1.msra.mxu0 0.0
  %962 = vmatprep.subr.mxu0 0.0
  %963 = vmatpush1.msra.mxu0 0.0
  %964 = vmatprep.subr.mxu0 0.0
  %965 = vmatpush1.msra.mxu0 0.0
  %966 = vmatprep.subr.mxu0 0.0
  %967 = vmatpush1.msra.mxu0 0.0
  %968 = vmatprep.subr.mxu0 0.0
  %969 = vmatpush1.msra.mxu0 0.0
  %970 = vmatprep.subr.mxu0 0.0
  %971 = vmatpush1.msra.mxu0 0.0
  %972 = vmatprep.subr.mxu0 0.0
  %973 = vmatpush1.msra.mxu0 0.0
  %974 = vmatprep.subr.mxu0 0.0
  %975 = vmatpush1.msra.mxu0 0.0
  %976 = vmatprep.subr.mxu0 0.0
  %977 = vmatpush1.msra.mxu0 0.0
  %978 = vmatprep.subr.mxu0 0.0
  %979 = vmatpush1.msra.mxu0 0.0
  %980 = vmatprep.subr.mxu0 0.0
  %981 = vmatpush1.msra.mxu0 0.0
  %982 = vmatprep.subr.mxu0 0.0
  %983 = vmatpush1.msra.mxu0 0.0
  %984 = vmatprep.subr.mxu0 0.0
  %985 = vmatpush1.msra.mxu0 0.0
  %986 = vmatprep.subr.mxu0 0.0
  %987 = vmatpush1.msra.mxu0 0.0
  %988 = vmatprep.subr.mxu0 0.0
  %989 = vmatpush1.msra.mxu0 0.0
  %990 = vmatprep.subr.mxu0 0.0
  %991 = vmatpush1.msra.mxu0 0.0
  %992 = vmatprep.subr.mxu0 0.0
  %993 = vmatpush1.msra.mxu0 0.0
  %994 = vmatprep.mubr.f32.mxu0 0.0
  %995 = vmatmul.mubr.f32.gmra.mrb[0].mxu0 %v745
  %v996 = vpop.f32.mrb[0].mxu0
  %v997 = vadd.f32 0.0, %v996
  %v998 = vpop.f32.mrb[0].mxu0
  %999 = vmatprep.mubr.f32.mxu0 0.0
  %1000 = vmatmul.mubr.f32.gmra.mrb[0].mxu0 %v748
  %v1001 = vpop.f32.mrb[0].mxu0
  %v1002 = vadd.f32 0.0, %v1001
  %v1003 = vpop.f32.mrb[0].mxu0
  %1004 = vdwg.mxu0
  %v1005 = vrcp.pop %v997
  %v1006 = vmul.f32 %v849, %v1005
  %v1007 = vrcp.pop %v1002
  %v1008 = vmul.f32 %v851, %v1007
  %1010 = vset.pattern.permute.xlu0 0
  %1011 = vperm.xlu0 %1010, %v1006
  %v1012 = vpop.permute.xlu0 %1011
  %1015 = vset.pattern.permute.xlu0 0
  %1016 = vperm.xlu0 %1015, %v1008
  %v1017 = vpop.permute.xlu0 %1016
  %v1019 = vmul.f32 %v1012, %v654
  %v1020 = vmul.f32 %v1017, %v655
  %1021 = vmatprep.subr.mxu0 0.0
  %1022 = vmatpush1.msra.mxu0 %v1019
  %1023 = vmatprep.subr.mxu0 0.0
  %1024 = vmatpush1.msra.mxu0 %v1020
  %1025 = vmatprep.subr.mxu0 0.0
  %1026 = vmatpush1.msra.mxu0 0.0
  %1027 = vmatprep.subr.mxu0 0.0
  %1028 = vmatpush1.msra.mxu0 0.0
  %1029 = vmatprep.subr.mxu0 0.0
  %1030 = vmatpush1.msra.mxu0 0.0
  %1031 = vmatprep.subr.mxu0 0.0
  %1032 = vmatpush1.msra.mxu0 0.0
  %1033 = vmatprep.subr.mxu0 0.0
  %1034 = vmatpush1.msra.mxu0 0.0
  %1035 = vmatprep.subr.mxu0 0.0
  %1036 = vmatpush1.msra.mxu0 0.0
  %1037 = vmatprep.subr.mxu0 0.0
  %1038 = vmatpush1.msra.mxu0 0.0
  %1039 = vmatprep.subr.mxu0 0.0
  %1040 = vmatpush1.msra.mxu0 0.0
  %1041 = vmatprep.subr.mxu0 0.0
  %1042 = vmatpush1.msra.mxu0 0.0
  %1043 = vmatprep.subr.mxu0 0.0
  %1044 = vmatpush1.msra.mxu0 0.0
  %1045 = vmatprep.subr.mxu0 0.0
  %1046 = vmatpush1.msra.mxu0 0.0
  %1047 = vmatprep.subr.mxu0 0.0
  %1048 = vmatpush1.msra.mxu0 0.0
  %1049 = vmatprep.subr.mxu0 0.0
  %1050 = vmatpush1.msra.mxu0 0.0
  %1051 = vmatprep.subr.mxu0 0.0
  %1052 = vmatpush1.msra.mxu0 0.0
  %1053 = vmatprep.subr.mxu0 0.0
  %1054 = vmatpush1.msra.mxu0 0.0
  %1055 = vmatprep.subr.mxu0 0.0
  %1056 = vmatpush1.msra.mxu0 0.0
  %1057 = vmatprep.subr.mxu0 0.0
  %1058 = vmatpush1.msra.mxu0 0.0
  %1059 = vmatprep.subr.mxu0 0.0
  %1060 = vmatpush1.msra.mxu0 0.0
  %1061 = vmatprep.subr.mxu0 0.0
  %1062 = vmatpush1.msra.mxu0 0.0
  %1063 = vmatprep.subr.mxu0 0.0
  %1064 = vmatpush1.msra.mxu0 0.0
  %1065 = vmatprep.subr.mxu0 0.0
  %1066 = vmatpush1.msra.mxu0 0.0
  %1067 = vmatprep.subr.mxu0 0.0
  %1068 = vmatpush1.msra.mxu0 0.0
  %1069 = vmatprep.subr.mxu0 0.0
  %1070 = vmatpush1.msra.mxu0 0.0
  %1071 = vmatprep.subr.mxu0 0.0
  %1072 = vmatpush1.msra.mxu0 0.0
  %1073 = vmatprep.subr.mxu0 0.0
  %1074 = vmatpush1.msra.mxu0 0.0
  %1075 = vmatprep.subr.mxu0 0.0
  %1076 = vmatpush1.msra.mxu0 0.0
  %1077 = vmatprep.subr.mxu0 0.0
  %1078 = vmatpush1.msra.mxu0 0.0
  %1079 = vmatprep.subr.mxu0 0.0
  %1080 = vmatpush1.msra.mxu0 0.0
  %1081 = vmatprep.subr.mxu0 0.0
  %1082 = vmatpush1.msra.mxu0 0.0
  %1083 = vmatprep.subr.mxu0 0.0
  %1084 = vmatpush1.msra.mxu0 0.0
  %1085 = vmatprep.mubr.f32.mxu0 0.0
  %1086 = vmatmul.mubr.f32.gmra.mrb[0].mxu0 %v855
  %v1087 = vpop.f32.mrb[0].mxu0
  %v1088 = vadd.f32 0.0, %v1087
  %v1089 = vpop.f32.mrb[0].mxu0
  %1090 = vdwg.mxu0
  %v1091 = vmul.f32 %v1088, %v740
  %v1092 = vld [vmem:[%s17] sm:$0xff]
  %v1093 = vld [vmem:[%s17 + $0x8] sm:$0xff]
  %v1094 = vld [vmem:[%s17 + $0x10] sm:$0xff]
  %v1095 = vld [vmem:[%s17 + $0x18] sm:$0xff]
  %v1096 = vld [vmem:[%s18] sm:$0x1]
  %v1098 = vlaneseq
  %v1099 = vshrl.u32 %v1098, 7
  %v1100 = vsub.s32 0, %v1099
  %v1101 = vrot.slane %v1096, %v1100
  %v1104 = vsel %vm112, %v1091, 0
  %1106 = vmatprep.subr.mxu0 0.0
  %1107 = vmatpush1.msra.mxu0 %v1092
  %1108 = vmatprep.subr.mxu0 0.0
  %1109 = vmatpush1.msra.mxu0 %v1093
  %1110 = vmatprep.subr.mxu0 0.0
  %1111 = vmatpush1.msra.mxu0 %v1094
  %1112 = vmatprep.subr.mxu0 0.0
  %1113 = vmatpush1.msra.mxu0 %v1095
  %1114 = vmatprep.subr.mxu0 0.0
  %1115 = vmatpush1.msra.mxu0 0.0
  %1116 = vmatprep.subr.mxu0 0.0
  %1117 = vmatpush1.msra.mxu0 0.0
  %1118 = vmatprep.subr.mxu0 0.0
  %1119 = vmatpush1.msra.mxu0 0.0
  %1120 = vmatprep.subr.mxu0 0.0
  %1121 = vmatpush1.msra.mxu0 0.0
  %1122 = vmatprep.subr.mxu0 0.0
  %1123 = vmatpush1.msra.mxu0 0.0
  %1124 = vmatprep.subr.mxu0 0.0
  %1125 = vmatpush1.msra.mxu0 0.0
  %1126 = vmatprep.subr.mxu0 0.0
  %1127 = vmatpush1.msra.mxu0 0.0
  %1128 = vmatprep.subr.mxu0 0.0
  %1129 = vmatpush1.msra.mxu0 0.0
  %1130 = vmatprep.subr.mxu0 0.0
  %1131 = vmatpush1.msra.mxu0 0.0
  %1132 = vmatprep.subr.mxu0 0.0
  %1133 = vmatpush1.msra.mxu0 0.0
  %1134 = vmatprep.subr.mxu0 0.0
  %1135 = vmatpush1.msra.mxu0 0.0
  %1136 = vmatprep.subr.mxu0 0.0
  %1137 = vmatpush1.msra.mxu0 0.0
  %1138 = vmatprep.subr.mxu0 0.0
  %1139 = vmatpush1.msra.mxu0 0.0
  %1140 = vmatprep.subr.mxu0 0.0
  %1141 = vmatpush1.msra.mxu0 0.0
  %1142 = vmatprep.subr.mxu0 0.0
  %1143 = vmatpush1.msra.mxu0 0.0
  %1144 = vmatprep.subr.mxu0 0.0
  %1145 = vmatpush1.msra.mxu0 0.0
  %1146 = vmatprep.subr.mxu0 0.0
  %1147 = vmatpush1.msra.mxu0 0.0
  %1148 = vmatprep.subr.mxu0 0.0
  %1149 = vmatpush1.msra.mxu0 0.0
  %1150 = vmatprep.subr.mxu0 0.0
  %1151 = vmatpush1.msra.mxu0 0.0
  %1152 = vmatprep.subr.mxu0 0.0
  %1153 = vmatpush1.msra.mxu0 0.0
  %1154 = vmatprep.subr.mxu0 0.0
  %1155 = vmatpush1.msra.mxu0 0.0
  %1156 = vmatprep.subr.mxu0 0.0
  %1157 = vmatpush1.msra.mxu0 0.0
  %1158 = vmatprep.subr.mxu0 0.0
  %1159 = vmatpush1.msra.mxu0 0.0
  %1160 = vmatprep.subr.mxu0 0.0
  %1161 = vmatpush1.msra.mxu0 0.0
  %1162 = vmatprep.subr.mxu0 0.0
  %1163 = vmatpush1.msra.mxu0 0.0
  %1164 = vmatprep.subr.mxu0 0.0
  %1165 = vmatpush1.msra.mxu0 0.0
  %1166 = vmatprep.subr.mxu0 0.0
  %1167 = vmatpush1.msra.mxu0 0.0
  %1168 = vmatprep.subr.mxu0 0.0
  %1169 = vmatpush1.msra.mxu0 0.0
  %1170 = vmatprep.mubr.f32.mxu0 0.0
  %1171 = vmatmul.mubr.f32.gmra.mrb[0].mxu0 %v1104
  %v1172 = vpop.f32.mrb[0].mxu0
  %v1173 = vadd.f32 %v1101, %v1172
  %v1174 = vpop.f32.mrb[0].mxu0
  %1175 = vdwg.mxu0
  %v1176 = vmax.f32 %v1173, 0.0
  %v1177 = vmul.f32 %v1176, 8.0
  %1178 = vmatprep.subr.mxu0 0.0
  %1179 = vmatpush1.msra.mxu0 %v560
  %1180 = vmatprep.subr.mxu0 0.0
  %1181 = vmatpush1.msra.mxu0 %v561
  %1182 = vmatprep.subr.mxu0 0.0
  %1183 = vmatpush1.msra.mxu0 0.0
  %1184 = vmatprep.subr.mxu0 0.0
  %1185 = vmatpush1.msra.mxu0 0.0
  %1186 = vmatprep.subr.mxu0 0.0
  %1187 = vmatpush1.msra.mxu0 0.0
  %1188 = vmatprep.subr.mxu0 0.0
  %1189 = vmatpush1.msra.mxu0 0.0
  %1190 = vmatprep.subr.mxu0 0.0
  %1191 = vmatpush1.msra.mxu0 0.0
  %1192 = vmatprep.subr.mxu0 0.0
  %1193 = vmatpush1.msra.mxu0 0.0
  %1194 = vmatprep.subr.mxu0 0.0
  %1195 = vmatpush1.msra.mxu0 0.0
  %1196 = vmatprep.subr.mxu0 0.0
  %1197 = vmatpush1.msra.mxu0 0.0
  %1198 = vmatprep.subr.mxu0 0.0
  %1199 = vmatpush1.msra.mxu0 0.0
  %1200 = vmatprep.subr.mxu0 0.0
  %1201 = vmatpush1.msra.mxu0 0.0
  %1202 = vmatprep.subr.mxu0 0.0
  %1203 = vmatpush1.msra.mxu0 0.0
  %1204 = vmatprep.subr.mxu0 0.0
  %1205 = vmatpush1.msra.mxu0 0.0
  %1206 = vmatprep.subr.mxu0 0.0
  %1207 = vmatpush1.msra.mxu0 0.0
  %1208 = vmatprep.subr.mxu0 0.0
  %1209 = vmatpush1.msra.mxu0 0.0
  %1210 = vmatprep.subr.mxu0 0.0
  %1211 = vmatpush1.msra.mxu0 0.0
  %1212 = vmatprep.subr.mxu0 0.0
  %1213 = vmatpush1.msra.mxu0 0.0
  %1214 = vmatprep.subr.mxu0 0.0
  %1215 = vmatpush1.msra.mxu0 0.0
  %1216 = vmatprep.subr.mxu0 0.0
  %1217 = vmatpush1.msra.mxu0 0.0
  %1218 = vmatprep.subr.mxu0 0.0
  %1219 = vmatpush1.msra.mxu0 0.0
  %1220 = vmatprep.subr.mxu0 0.0
  %1221 = vmatpush1.msra.mxu0 0.0
  %1222 = vmatprep.subr.mxu0 0.0
  %1223 = vmatpush1.msra.mxu0 0.0
  %1224 = vmatprep.subr.mxu0 0.0
  %1225 = vmatpush1.msra.mxu0 0.0
  %1226 = vmatprep.subr.mxu0 0.0
  %1227 = vmatpush1.msra.mxu0 0.0
  %1228 = vmatprep.subr.mxu0 0.0
  %1229 = vmatpush1.msra.mxu0 0.0
  %1230 = vmatprep.subr.mxu0 0.0
  %1231 = vmatpush1.msra.mxu0 0.0
  %1232 = vmatprep.subr.mxu0 0.0
  %1233 = vmatpush1.msra.mxu0 0.0
  %1234 = vmatprep.subr.mxu0 0.0
  %1235 = vmatpush1.msra.mxu0 0.0
  %1236 = vmatprep.subr.mxu0 0.0
  %1237 = vmatpush1.msra.mxu0 0.0
  %1238 = vmatprep.subr.mxu0 0.0
  %1239 = vmatpush1.msra.mxu0 0.0
  %1240 = vmatprep.subr.mxu0 0.0
  %1241 = vmatpush1.msra.mxu0 0.0
  %1242 = vmatprep.mubr.f32.mxu0 0.0
  %1243 = vmatmul.mubr.f32.gmra.mrb[0].mxu0 %v855
  %v1244 = vpop.f32.mrb[0].mxu0
  %v1245 = vadd.f32 %v1177, %v1244
  %v1246 = vpop.f32.mrb[0].mxu0
  %1247 = vdwg.mxu0
  %v1248 = vld [vmem:[%s19] sm:$0xff]
  %v1249 = vld [vmem:[%s19 + $0x8] sm:$0xff]
  %v1250 = vld [vmem:[%s19 + $0x10] sm:$0xff]
  %v1251 = vld [vmem:[%s19 + $0x18] sm:$0xff]
  %v1252 = vld [vmem:[%s20] sm:$0x1]
  %v1254 = vlaneseq
  %v1255 = vshrl.u32 %v1254, 7
  %v1256 = vsub.s32 0, %v1255
  %v1257 = vrot.slane %v1252, %v1256
  %v1260 = vsel %vm112, %v1245, 0
  %1262 = vmatprep.subr.mxu0 0.0
  %1263 = vmatpush1.msra.mxu0 %v1248
  %1264 = vmatprep.subr.mxu0 0.0
  %1265 = vmatpush1.msra.mxu0 %v1249
  %1266 = vmatprep.subr.mxu0 0.0
  %1267 = vmatpush1.msra.mxu0 %v1250
  %1268 = vmatprep.subr.mxu0 0.0
  %1269 = vmatpush1.msra.mxu0 %v1251
  %1270 = vmatprep.subr.mxu0 0.0
  %1271 = vmatpush1.msra.mxu0 0.0
  %1272 = vmatprep.subr.mxu0 0.0
  %1273 = vmatpush1.msra.mxu0 0.0
  %1274 = vmatprep.subr.mxu0 0.0
  %1275 = vmatpush1.msra.mxu0 0.0
  %1276 = vmatprep.subr.mxu0 0.0
  %1277 = vmatpush1.msra.mxu0 0.0
  %1278 = vmatprep.subr.mxu0 0.0
  %1279 = vmatpush1.msra.mxu0 0.0
  %1280 = vmatprep.subr.mxu0 0.0
  %1281 = vmatpush1.msra.mxu0 0.0
  %1282 = vmatprep.subr.mxu0 0.0
  %1283 = vmatpush1.msra.mxu0 0.0
  %1284 = vmatprep.subr.mxu0 0.0
  %1285 = vmatpush1.msra.mxu0 0.0
  %1286 = vmatprep.subr.mxu0 0.0
  %1287 = vmatpush1.msra.mxu0 0.0
  %1288 = vmatprep.subr.mxu0 0.0
  %1289 = vmatpush1.msra.mxu0 0.0
  %1290 = vmatprep.subr.mxu0 0.0
  %1291 = vmatpush1.msra.mxu0 0.0
  %1292 = vmatprep.subr.mxu0 0.0
  %1293 = vmatpush1.msra.mxu0 0.0
  %1294 = vmatprep.subr.mxu0 0.0
  %1295 = vmatpush1.msra.mxu0 0.0
  %1296 = vmatprep.subr.mxu0 0.0
  %1297 = vmatpush1.msra.mxu0 0.0
  %1298 = vmatprep.subr.mxu0 0.0
  %1299 = vmatpush1.msra.mxu0 0.0
  %1300 = vmatprep.subr.mxu0 0.0
  %1301 = vmatpush1.msra.mxu0 0.0
  %1302 = vmatprep.subr.mxu0 0.0
  %1303 = vmatpush1.msra.mxu0 0.0
  %1304 = vmatprep.subr.mxu0 0.0
  %1305 = vmatpush1.msra.mxu0 0.0
  %1306 = vmatprep.subr.mxu0 0.0
  %1307 = vmatpush1.msra.mxu0 0.0
  %1308 = vmatprep.subr.mxu0 0.0
  %1309 = vmatpush1.msra.mxu0 0.0
  %1310 = vmatprep.subr.mxu0 0.0
  %1311 = vmatpush1.msra.mxu0 0.0
  %1312 = vmatprep.subr.mxu0 0.0
  %1313 = vmatpush1.msra.mxu0 0.0
  %1314 = vmatprep.subr.mxu0 0.0
  %1315 = vmatpush1.msra.mxu0 0.0
  %1316 = vmatprep.subr.mxu0 0.0
  %1317 = vmatpush1.msra.mxu0 0.0
  %1318 = vmatprep.subr.mxu0 0.0
  %1319 = vmatpush1.msra.mxu0 0.0
  %1320 = vmatprep.subr.mxu0 0.0
  %1321 = vmatpush1.msra.mxu0 0.0
  %1322 = vmatprep.subr.mxu0 0.0
  %1323 = vmatpush1.msra.mxu0 0.0
  %1324 = vmatprep.subr.mxu0 0.0
  %1325 = vmatpush1.msra.mxu0 0.0
  %1326 = vmatprep.mubr.f32.mxu0 0.0
  %1327 = vmatmul.mubr.f32.gmra.mrb[0].mxu0 %v1260
  %v1328 = vpop.f32.mrb[0].mxu0
  %v1329 = vadd.f32 %v1257, %v1328
  %v1330 = vpop.f32.mrb[0].mxu0
  %1331 = vdwg.mxu0
  %v1332 = vmax.f32 %v1329, 0.0
  %v1333 = vld [vmem:[%s21] sm:$0xff]
  %v1334 = vld [vmem:[%s21 + $0x8] sm:$0xff]
  %v1335 = vld [vmem:[%s21 + $0x10] sm:$0xff]
  %v1336 = vld [vmem:[%s21 + $0x18] sm:$0xff]
  %v1338 = vsel %vm112, %v1332, 0
  %1340 = vmatprep.subr.mxu0 0.0
  %1341 = vmatpush1.msra.mxu0 %v1333
  %1342 = vmatprep.subr.mxu0 0.0
  %1343 = vmatpush1.msra.mxu0 %v1334
  %1344 = vmatprep.subr.mxu0 0.0
  %1345 = vmatpush1.msra.mxu0 %v1335
  %1346 = vmatprep.subr.mxu0 0.0
  %1347 = vmatpush1.msra.mxu0 %v1336
  %1348 = vmatprep.subr.mxu0 0.0
  %1349 = vmatpush1.msra.mxu0 0.0
  %1350 = vmatprep.subr.mxu0 0.0
  %1351 = vmatpush1.msra.mxu0 0.0
  %1352 = vmatprep.subr.mxu0 0.0
  %1353 = vmatpush1.msra.mxu0 0.0
  %1354 = vmatprep.subr.mxu0 0.0
  %1355 = vmatpush1.msra.mxu0 0.0
  %1356 = vmatprep.subr.mxu0 0.0
  %1357 = vmatpush1.msra.mxu0 0.0
  %1358 = vmatprep.subr.mxu0 0.0
  %1359 = vmatpush1.msra.mxu0 0.0
  %1360 = vmatprep.subr.mxu0 0.0
  %1361 = vmatpush1.msra.mxu0 0.0
  %1362 = vmatprep.subr.mxu0 0.0
  %1363 = vmatpush1.msra.mxu0 0.0
  %1364 = vmatprep.subr.mxu0 0.0
  %1365 = vmatpush1.msra.mxu0 0.0
  %1366 = vmatprep.subr.mxu0 0.0
  %1367 = vmatpush1.msra.mxu0 0.0
  %1368 = vmatprep.subr.mxu0 0.0
  %1369 = vmatpush1.msra.mxu0 0.0
  %1370 = vmatprep.subr.mxu0 0.0
  %1371 = vmatpush1.msra.mxu0 0.0
  %1372 = vmatprep.subr.mxu0 0.0
  %1373 = vmatpush1.msra.mxu0 0.0
  %1374 = vmatprep.subr.mxu0 0.0
  %1375 = vmatpush1.msra.mxu0 0.0
  %1376 = vmatprep.subr.mxu0 0.0
  %1377 = vmatpush1.msra.mxu0 0.0
  %1378 = vmatprep.subr.mxu0 0.0
  %1379 = vmatpush1.msra.mxu0 0.0
  %1380 = vmatprep.subr.mxu0 0.0
  %1381 = vmatpush1.msra.mxu0 0.0
  %1382 = vmatprep.subr.mxu0 0.0
  %1383 = vmatpush1.msra.mxu0 0.0
  %1384 = vmatprep.subr.mxu0 0.0
  %1385 = vmatpush1.msra.mxu0 0.0
  %1386 = vmatprep.subr.mxu0 0.0
  %1387 = vmatpush1.msra.mxu0 0.0
  %1388 = vmatprep.subr.mxu0 0.0
  %1389 = vmatpush1.msra.mxu0 0.0
  %1390 = vmatprep.subr.mxu0 0.0
  %1391 = vmatpush1.msra.mxu0 0.0
  %1392 = vmatprep.subr.mxu0 0.0
  %1393 = vmatpush1.msra.mxu0 0.0
  %1394 = vmatprep.subr.mxu0 0.0
  %1395 = vmatpush1.msra.mxu0 0.0
  %1396 = vmatprep.subr.mxu0 0.0
  %1397 = vmatpush1.msra.mxu0 0.0
  %1398 = vmatprep.subr.mxu0 0.0
  %1399 = vmatpush1.msra.mxu0 0.0
  %1400 = vmatprep.subr.mxu0 0.0
  %1401 = vmatpush1.msra.mxu0 0.0
  %1402 = vmatprep.subr.mxu0 0.0
  %1403 = vmatpush1.msra.mxu0 0.0
  %1404 = vmatprep.mubr.f32.mxu0 0.0
  %1405 = vmatmul.mubr.f32.gmra.mrb[0].mxu0 %v1338
  %v1406 = vpop.f32.mrb[0].mxu0
  %v1407 = vadd.f32 0.0, %v1406
  %v1408 = vpop.f32.mrb[0].mxu0
  %1409 = vdwg.mxu0
  %v1410 = vld [vmem:[%s6] sm:$0xff]
  %v1411 = vld [vmem:[%s5] sm:$0xff]
  %v1412 = vld [vmem:[%s22] sm:$0xff]
  %v1413 = vld [vmem:[%s22 + $0x8] sm:$0xff]
  %v1414 = vld [vmem:[%s22 + $0x10] sm:$0xff]
  %v1415 = vld [vmem:[%s22 + $0x18] sm:$0xff]
  %v1417 = vsel %vm112, %v1411, 0
  %1419 = vmatprep.subr.mxu0 0.0
  %1420 = vmatpush1.msra.mxu0 %v1412
  %1421 = vmatprep.subr.mxu0 0.0
  %1422 = vmatpush1.msra.mxu0 %v1413
  %1423 = vmatprep.subr.mxu0 0.0
  %1424 = vmatpush1.msra.mxu0 %v1414
  %1425 = vmatprep.subr.mxu0 0.0
  %1426 = vmatpush1.msra.mxu0 %v1415
  %1427 = vmatprep.subr.mxu0 0.0
  %1428 = vmatpush1.msra.mxu0 0.0
  %1429 = vmatprep.subr.mxu0 0.0
  %1430 = vmatpush1.msra.mxu0 0.0
  %1431 = vmatprep.subr.mxu0 0.0
  %1432 = vmatpush1.msra.mxu0 0.0
  %1433 = vmatprep.subr.mxu0 0.0
  %1434 = vmatpush1.msra.mxu0 0.0
  %1435 = vmatprep.subr.mxu0 0.0
  %1436 = vmatpush1.msra.mxu0 0.0
  %1437 = vmatprep.subr.mxu0 0.0
  %1438 = vmatpush1.msra.mxu0 0.0
  %1439 = vmatprep.subr.mxu0 0.0
  %1440 = vmatpush1.msra.mxu0 0.0
  %1441 = vmatprep.subr.mxu0 0.0
  %1442 = vmatpush1.msra.mxu0 0.0
  %1443 = vmatprep.subr.mxu0 0.0
  %1444 = vmatpush1.msra.mxu0 0.0
  %1445 = vmatprep.subr.mxu0 0.0
  %1446 = vmatpush1.msra.mxu0 0.0
  %1447 = vmatprep.subr.mxu0 0.0
  %1448 = vmatpush1.msra.mxu0 0.0
  %1449 = vmatprep.subr.mxu0 0.0
  %1450 = vmatpush1.msra.mxu0 0.0
  %1451 = vmatprep.subr.mxu0 0.0
  %1452 = vmatpush1.msra.mxu0 0.0
  %1453 = vmatprep.subr.mxu0 0.0
  %1454 = vmatpush1.msra.mxu0 0.0
  %1455 = vmatprep.subr.mxu0 0.0
  %1456 = vmatpush1.msra.mxu0 0.0
  %1457 = vmatprep.subr.mxu0 0.0
  %1458 = vmatpush1.msra.mxu0 0.0
  %1459 = vmatprep.subr.mxu0 0.0
  %1460 = vmatpush1.msra.mxu0 0.0
  %1461 = vmatprep.subr.mxu0 0.0
  %1462 = vmatpush1.msra.mxu0 0.0
  %1463 = vmatprep.subr.mxu0 0.0
  %1464 = vmatpush1.msra.mxu0 0.0
  %1465 = vmatprep.subr.mxu0 0.0
  %1466 = vmatpush1.msra.mxu0 0.0
  %1467 = vmatprep.subr.mxu0 0.0
  %1468 = vmatpush1.msra.mxu0 0.0
  %1469 = vmatprep.subr.mxu0 0.0
  %1470 = vmatpush1.msra.mxu0 0.0
  %1471 = vmatprep.subr.mxu0 0.0
  %1472 = vmatpush1.msra.mxu0 0.0
  %1473 = vmatprep.subr.mxu0 0.0
  %1474 = vmatpush1.msra.mxu0 0.0
  %1475 = vmatprep.subr.mxu0 0.0
  %1476 = vmatpush1.msra.mxu0 0.0
  %1477 = vmatprep.subr.mxu0 0.0
  %1478 = vmatpush1.msra.mxu0 0.0
  %1479 = vmatprep.subr.mxu0 0.0
  %1480 = vmatpush1.msra.mxu0 0.0
  %1481 = vmatprep.subr.mxu0 0.0
  %1482 = vmatpush1.msra.mxu0 0.0
  %1483 = vmatprep.mubr.f32.mxu0 0.0
  %1484 = vmatmul.mubr.f32.gmra.mrb[0].mxu0 %v1417
  %v1485 = vpop.f32.mrb[0].mxu0
  %v1486 = vadd.f32 0.0, %v1485
  %v1487 = vpop.f32.mrb[0].mxu0
  %1488 = vdwg.mxu0
  %v1490 = vsel %vm743, %v1410, 0
  %v1493 = vsel %vm750, %v1407, 0
  %1495 = vmatprep.subr.mxu0 0.0
  %1496 = vmatpush1.msra.mxu0 %v1493
  %1497 = vmatprep.subr.mxu0 0.0
  %1498 = vmatpush1.msra.mxu0 0.0
  %1499 = vmatprep.subr.mxu0 0.0
  %1500 = vmatpush1.msra.mxu0 0.0
  %1501 = vmatprep.subr.mxu0 0.0
  %1502 = vmatpush1.msra.mxu0 0.0
  %1503 = vmatprep.subr.mxu0 0.0
  %1504 = vmatpush1.msra.mxu0 0.0
  %1505 = vmatprep.subr.mxu0 0.0
  %1506 = vmatpush1.msra.mxu0 0.0
  %1507 = vmatprep.subr.mxu0 0.0
  %1508 = vmatpush1.msra.mxu0 0.0
  %1509 = vmatprep.subr.mxu0 0.0
  %1510 = vmatpush1.msra.mxu0 0.0
  %1511 = vmatprep.subr.mxu0 0.0
  %1512 = vmatpush1.msra.mxu0 0.0
  %1513 = vmatprep.subr.mxu0 0.0
  %1514 = vmatpush1.msra.mxu0 0.0
  %1515 = vmatprep.subr.mxu0 0.0
  %1516 = vmatpush1.msra.mxu0 0.0
  %1517 = vmatprep.subr.mxu0 0.0
  %1518 = vmatpush1.msra.mxu0 0.0
  %1519 = vmatprep.subr.mxu0 0.0
  %1520 = vmatpush1.msra.mxu0 0.0
  %1521 = vmatprep.subr.mxu0 0.0
  %1522 = vmatpush1.msra.mxu0 0.0
  %1523 = vmatprep.subr.mxu0 0.0
  %1524 = vmatpush1.msra.mxu0 0.0
  %1525 = vmatprep.subr.mxu0 0.0
  %1526 = vmatpush1.msra.mxu0 0.0
  %1527 = vmatprep.subr.mxu0 0.0
  %1528 = vmatpush1.msra.mxu0 0.0
  %1529 = vmatprep.subr.mxu0 0.0
  %1530 = vmatpush1.msra.mxu0 0.0
  %1531 = vmatprep.subr.mxu0 0.0
  %1532 = vmatpush1.msra.mxu0 0.0
  %1533 = vmatprep.subr.mxu0 0.0
  %1534 = vmatpush1.msra.mxu0 0.0
  %1535 = vmatprep.subr.mxu0 0.0
  %1536 = vmatpush1.msra.mxu0 0.0
  %1537 = vmatprep.subr.mxu0 0.0
  %1538 = vmatpush1.msra.mxu0 0.0
  %1539 = vmatprep.subr.mxu0 0.0
  %1540 = vmatpush1.msra.mxu0 0.0
  %1541 = vmatprep.subr.mxu0 0.0
  %1542 = vmatpush1.msra.mxu0 0.0
  %1543 = vmatprep.subr.mxu0 0.0
  %1544 = vmatpush1.msra.mxu0 0.0
  %1545 = vmatprep.subr.mxu0 0.0
  %1546 = vmatpush1.msra.mxu0 0.0
  %1547 = vmatprep.subr.mxu0 0.0
  %1548 = vmatpush1.msra.mxu0 0.0
  %1549 = vmatprep.subr.mxu0 0.0
  %1550 = vmatpush1.msra.mxu0 0.0
  %1551 = vmatprep.subr.mxu0 0.0
  %1552 = vmatpush1.msra.mxu0 0.0
  %1553 = vmatprep.subr.mxu0 0.0
  %1554 = vmatpush1.msra.mxu0 0.0
  %1555 = vmatprep.subr.mxu0 0.0
  %1556 = vmatpush1.msra.mxu0 0.0
  %1557 = vmatprep.subr.mxu0 0.0
  %1558 = vmatpush1.msra.mxu0 0.0
  %1559 = vmatprep.mubr.f32.mxu0 0.0
  %1560 = vmatmul.mubr.f32.gmra.mrb[0].mxu0 %v1490
  %v1561 = vpop.f32.mrb[0].mxu0
  %v1562 = vadd.f32 %v1486, %v1561
  %v1563 = vpop.f32.mrb[0].mxu0
  %1564 = vdwg.mxu0
  %v1565 = vld [vmem:[%s23] sm:$0x1]
  %v1567 = vlaneseq
  %v1568 = vshrl.u32 %v1567, 7
  %v1569 = vsub.s32 0, %v1568
  %v1570 = vrot.slane %v1565, %v1569
  %v1572 = vadd.f32 %v1562, %v1570
  %v1573 = vmax.f32 %v1572, 0.0
  %v1574 = vld [vmem:[%s24] sm:$0x1]
  %v1576 = vlaneseq
  %v1577 = vshrl.u32 %v1576, 7
  %v1578 = vsub.s32 0, %v1577
  %v1579 = vrot.slane %v1574, %v1578
  %v1581 = vmul.f32 %v1573, %v1579
  %v1582 = vsel %vm112, %v1581, 0.0
  %1583 = vadd.xlane.f32.xlu0 %v1582
  %v1584 = vpop.xlane.xlu0 %1583
  %v1585 = vld [vmem:[#allocation2] sm:$0x1]
  %v1587 = vlaneseq
  %v1588 = vshrl.u32 %v1587, 7
  %v1589 = vsub.s32 0, %v1588
  %v1590 = vrot.slane %v1585, %v1589
  %v1592 = vadd.f32 %v1584, %v1590
  %vm1593 = vcmask 7168
  %1594 = vst.msk [vmem:[%s26] sm:$0xff] %vm1593, %v1592
  // Predicated region
  $region106: #{net_forward.1} parent=0 // pred_check
    _
  $region107: #{net_forward.1} parent=0 // pred_check_branch
    %1596 = sbr.rel (0) target = $region109
  $region108: #{net_forward.1} parent=0 // pred_region
    _
  $region109: #{net_forward.1} parent=0 // pred_fallthru
    _
  // Predicated region
  $region110: #{net_forward.1} parent=0 // pred_check
    _
  $region111: #{net_forward.1} parent=0 // pred_check_branch
    %1598 = sbr.rel (0) target = $region113
  $region112: #{net_forward.1} parent=0 // pred_region
    _
  $region113: #{net_forward.1} parent=0 // pred_fallthru
    _

</llo_original>
